<compile_context>
chip_gen: v5e
topology: v5e:2x2
jax: 0.10.0
libtpu: 0.0.40
codegen_flags: <defaults>
</compile_context>

<pallas_src>
import functools
import math

import jax
import jax.numpy as jnp
import numpy as np
from jax import lax
from jax.experimental import pallas as pl
from jax.experimental.pallas import tpu as pltpu


# ----------------------------------------------------------------------------- helpers
def _exact_reciprocal(u):
    # EUP approximate reciprocal + one Newton-Raphson step -> f32-accurate 1/u while
    # keeping the divide off the VALU.
    r = pl.reciprocal(u, approx=True)
    return r * (2.0 - u * r)


def _gelu_exact(x):
    # Exact (erf-based) GELU, matching torch.nn.GELU().  erf via the Abramowitz &
    # Stegun 7.1.26 polynomial (|abs err| < 1.5e-7, i.e. f32-exact).  The 1/(1+p|z|)
    # divide runs on the EUP; sign handling is one select.
    a1, a2, a3, a4, a5 = (0.254829592, -0.284496736, 1.421413741,
                          -1.453152027, 1.061405429)
    p = 0.3275911
    z = x * 0.7071067811865476
    az = jnp.abs(z)
    t = _exact_reciprocal(1.0 + p * az)
    poly = ((((a5 * t + a4) * t + a3) * t + a2) * t + a1) * t
    e = poly * jnp.exp(-z * z)                        # erfc(|z|)
    one_plus_erf = jnp.where(x >= 0.0, 2.0 - e, e)    # 1 + erf(z)
    return 0.5 * x * one_plus_erf


def _layernorm(v, gamma, beta, eps=1e-5):
    mu = jnp.mean(v, axis=-1, keepdims=True)
    var = jnp.mean((v - mu) * (v - mu), axis=-1, keepdims=True)
    return (v - mu) * lax.rsqrt(var + eps) * gamma + beta


# ----------------------------------------------------------------------------- kernel
def _encoder_block_kernel(x_ref, cos_ref, sin_ref,
                          wqkv_ref, wo_ref, bo_ref,
                          w1_ref, b1_ref, w2_ref, b2_ref,
                          g1_ref, be1_ref, g2_ref, be2_ref,
                          out_ref,
                          *, bt, n_heads, d_head, matmul_dtype):
    S, D = cos_ref.shape
    H, Dh = n_heads, d_head

    x = x_ref[...].astype(jnp.float32)                                 # (Bt, S, D)
    x_flat = x[0] if bt == 1 else jnp.concatenate(
        [x[b] for b in range(bt)], axis=0)                             # (Bt*S, D)

    # ---------------- attention block: x + att(norm1(x)) ----------------
    h1 = _layernorm(x_flat, g1_ref[...], be1_ref[...])
    # Extended QKV: columns are [q*scale | q_swapped*scale | k | k_swapped | v].
    qkv = jnp.dot(h1.astype(matmul_dtype), wqkv_ref[...],
                  preferred_element_type=jnp.float32)                  # (Bt*S, 5D) f32

    cos = cos_ref[...]                                                 # (S, D)
    sin = sin_ref[...]                                                 # (S, D)

    q_h, k_h, v_h = [], [], []
    for b in range(bt):
        r0 = b * S
        # RoPE on full-width slabs: rope(t) = t*cos_D + t_swapped*sin_D (no shuffles).
        qb = qkv[r0:r0 + S, 0:D] * cos + qkv[r0:r0 + S, D:2 * D] * sin
        kb = qkv[r0:r0 + S, 2 * D:3 * D] * cos + qkv[r0:r0 + S, 3 * D:4 * D] * sin
        vb = qkv[r0:r0 + S, 4 * D:5 * D]
        for h in range(H):
            c0 = h * Dh
            q_h.append(qb[:, c0:c0 + Dh])
            k_h.append(kb[:, c0:c0 + Dh])
            v_h.append(vb[:, c0:c0 + Dh])
    q3 = jnp.stack(q_h, axis=0).astype(matmul_dtype)                   # (Bt*H, S, Dh)
    k3 = jnp.stack(k_h, axis=0).astype(matmul_dtype)
    v3 = jnp.stack(v_h, axis=0).astype(matmul_dtype)

    # Causal mask applied BEFORE the row max (avoids exp-underflow / 1/0 corner case).
    qi = lax.broadcasted_iota(jnp.int32, (S, S), 0)
    ki = lax.broadcasted_iota(jnp.int32, (S, S), 1)
    causal = ki <= qi                                                  # (S, S)

    s = jnp.einsum('bqd,bkd->bqk', q3, k3,
                   preferred_element_type=jnp.float32)                 # (Bt*H, S, S)
    s = jnp.where(causal, s, -1e30)
    m = jnp.max(s, axis=-1, keepdims=True)
    p = jnp.exp(s - m)                                                 # un-normalized
    l = jnp.sum(p, axis=-1, keepdims=True)                             # (Bt*H, S, 1)
    att3 = jnp.einsum('bqk,bkd->bqd', p.astype(matmul_dtype), v3,
                      preferred_element_type=jnp.float32)              # (Bt*H, S, Dh)
    att3 = att3 * _exact_reciprocal(l)                                 # normalize accum

    # Merge heads in registers (lane concat) -> (Bt*S, D); no VMEM scratch round-trip.
    rows = [jnp.concatenate([att3[b * H + h] for h in range(H)], axis=-1)
            for b in range(bt)]
    att_flat = rows[0] if bt == 1 else jnp.concatenate(rows, axis=0)

    att = jnp.dot(att_flat.astype(matmul_dtype), wo_ref[...],
                  preferred_element_type=jnp.float32) + bo_ref[...]
    # resid_dropout: identity (eval mode)
    x1 = x_flat + att

    # ---------------- feed-forward block: x + ff(norm2(x)) ----------------
    h2 = _layernorm(x1, g2_ref[...], be2_ref[...])
    f = jnp.dot(h2.astype(matmul_dtype), w1_ref[...],
                preferred_element_type=jnp.float32) + b1_ref[...]
    f = _gelu_exact(f)
    f = jnp.dot(f.astype(matmul_dtype), w2_ref[...],
                preferred_element_type=jnp.float32) + b2_ref[...]
    # ff_dropout: identity (eval mode)
    y = x1 + f                                                         # (Bt*S, D)

    for b in range(bt):
        out_ref[b] = y[b * S:(b + 1) * S, :].astype(out_ref.dtype)


# ----------------------------------------------------------------------------- wrapper
def fused_encoder_block(x, freqs_cis, params, *, matmul_dtype=jnp.bfloat16,
                        batch_block=None):
    B, S, D = x.shape
    H = int(params['n_heads'])
    Dh = D // H
    d2 = Dh // 2
    scale = 1.0 / math.sqrt(Dh)

    # Batch folding: as many rows per grid step as reasonable, while keeping >=2 grid
    # steps when possible so both v7x TensorCores get work (megacore "parallel").
    if batch_block is None:
        batch_block = max(1, min(8, B // 2))
    batch_block = max(1, min(int(batch_block), B))
    while B % batch_block:
        batch_block -= 1
    Bt = batch_block

    # Full-width RoPE tables (per-head tiled):  cos_D = [cos|cos]xH, sin_D = [-sin|sin]xH
    cos = freqs_cis[..., 0].astype(jnp.float32)                        # (S, Dh//2)
    sin = freqs_cis[..., 1].astype(jnp.float32)
    cos_D = jnp.tile(jnp.concatenate([cos, cos], axis=-1), (1, H))     # (S, D)
    sin_D = jnp.tile(jnp.concatenate([-sin, sin], axis=-1), (1, H))    # (S, D)

    # Extended QKV weight (D, 5D): rotate-half swap (static per-head column permutation)
    # and the 1/sqrt(Dh) scale folded into extra Q/K column blocks -> rope needs no
    # in-kernel lane shuffles:  rope(q) = q*cos_D + q_swapped*sin_D.
    w_qkv = params['w_qkv']
    w_q, w_k, w_v = w_qkv[:, :D], w_qkv[:, D:2 * D], w_qkv[:, 2 * D:]
    col = np.arange(D)
    perm = (col // Dh) * Dh + (col % Dh + d2) % Dh                     # within-head swap
    w_qkv_ext = jnp.concatenate(
        [w_q * scale, w_q[:, perm] * scale, w_k, w_k[:, perm], w_v],
        axis=1).astype(matmul_dtype)                                   # (D, 5D)

    w_attp = params['w_attp'].astype(matmul_dtype)
    w_ff1 = params['w_ff1'].astype(matmul_dtype)
    w_ff2 = params['w_ff2'].astype(matmul_dtype)
    small = [params['b_attp'], params['b_ff1'], params['b_ff2'],
             params['g1'], params['b1n'], params['g2'], params['b2n']]

    def full2d(a):
        # TODO(synk): pipeline_mode=pl.Buffered(1) for these grid-constant blocks to
        # halve resident VMEM on v7x once single-buffering is plumbed through.
        return pl.BlockSpec(a.shape, lambda b: (0, 0))

    kernel = functools.partial(_encoder_block_kernel, bt=Bt, n_heads=H, d_head=Dh,
                               matmul_dtype=matmul_dtype)

    # VMEM budget: double-buffered IO blocks + resident weights/tables + generous
    # headroom for temporaries, clamped to the chip's real per-core VMEM capacity.
    mm_bytes = jnp.dtype(matmul_dtype).itemsize
    F = params['w_ff1'].shape[1]
    resident = (w_qkv_ext.size + w_attp.size + w_ff1.size + w_ff2.size) * mm_bytes
    resident += (cos_D.size + sin_D.size) * 4 + sum(int(a.nbytes) for a in small)
    io_block = 2 * Bt * S * D * 4
    temporaries = 4 * Bt * S * (5 * D + F + 2 * H * S) * 4
    budget = 2 * (resident + io_block) + temporaries + (4 << 20)
    try:
        vmem_cap = int(pltpu.get_tpu_info().vmem_capacity_bytes)
    except Exception:
        vmem_cap = 64 << 20                                            # v7x-safe floor
    vmem_limit = int(min(max(32 << 20, budget), vmem_cap - (8 << 20)))

    return pl.pallas_call(
        kernel,
        out_shape=jax.ShapeDtypeStruct((B, S, D), x.dtype),
        grid_spec=pltpu.PrefetchScalarGridSpec(
            num_scalar_prefetch=0,
            grid=(B // Bt,),
            in_specs=[
                pl.BlockSpec((Bt, S, D), lambda b: (b, 0, 0)),         # x
                full2d(cos_D), full2d(sin_D),                          # RoPE tables
                full2d(w_qkv_ext),
                full2d(w_attp), full2d(params['b_attp']),
                full2d(w_ff1), full2d(params['b_ff1']),
                full2d(w_ff2), full2d(params['b_ff2']),
                full2d(params['g1']), full2d(params['b1n']),
                full2d(params['g2']), full2d(params['b2n']),
            ],
            out_specs=pl.BlockSpec((Bt, S, D), lambda b: (b, 0, 0)),
        ),
        compiler_params=pltpu.CompilerParams(
            dimension_semantics=("parallel",),                         # megacore over batch
            vmem_limit_bytes=vmem_limit),
    )(x, cos_D, sin_D,
      w_qkv_ext, w_attp, params['b_attp'],
      w_ff1, params['b_ff1'], w_ff2, params['b_ff2'],
      params['g1'], params['b1n'], params['g2'], params['b2n'])


# ----------------------------------------------------------------------------- reference
def reference(x, freqs_cis, params):
    B, S, D = x.shape
    H = params['n_heads']
    Dh = D // H
    d2 = Dh // 2

    def ln(v, g, b):
        mu = v.mean(-1, keepdims=True)
        var = ((v - mu) ** 2).mean(-1, keepdims=True)
        return (v - mu) / jnp.sqrt(var + 1e-5) * g + b

    h = ln(x, params['g1'][0], params['b1n'][0])
    qkv = h @ params['w_qkv']
    q, k, v = jnp.split(qkv, 3, axis=-1)
    q = q.reshape(B, S, H, Dh)
    k = k.reshape(B, S, H, Dh)
    v = v.reshape(B, S, H, Dh)

    cos = freqs_cis[..., 0][None, :, None]
    sin = freqs_cis[..., 1][None, :, None]

    def rope(t):
        t1, t2 = t[..., :d2], t[..., d2:]
        return jnp.concatenate([t1 * cos - t2 * sin, t2 * cos + t1 * sin], -1)

    q, k = rope(q), rope(k)
    q, k, v = map(lambda t: t.transpose(0, 2, 1, 3), (q, k, v))        # (B, H, S, Dh)
    s = jnp.einsum('bhqd,bhkd->bhqk', q, k) / math.sqrt(Dh)
    mask = jnp.tril(jnp.ones((S, S), bool))
    s = jnp.where(mask, s, -jnp.inf)
    p = jax.nn.softmax(s, axis=-1)
    att = jnp.einsum('bhqk,bhkd->bhqd', p, v)
    att = att.transpose(0, 2, 1, 3).reshape(B, S, D)
    att = att @ params['w_attp'] + params['b_attp'][0]
    x = x + att

    h2 = ln(x, params['g2'][0], params['b2n'][0])
    f = h2 @ params['w_ff1'] + params['b_ff1'][0]
    f = jax.nn.gelu(f, approximate=False)
    f = f @ params['w_ff2'] + params['b_ff2'][0]
    return x + f


# ----------------------------------------------------------------------------- main
if __name__ == "__main__":
    # ModelConfig-equivalent small shapes: d_model=32, n_heads=4, ff_mult=4,
    # max_seq_len=8, drop_p=0.1 (dropout is identity in eval).
    B, S, D, H, FF_MULT = 2, 8, 32, 4, 4
    Dh = D // H
    Fdim = D * FF_MULT

    key = jax.random.PRNGKey(0)
    keys = jax.random.split(key, 8)
    x = jax.random.normal(keys[0], (B, S, D), jnp.float32)

    params = dict(
        n_heads=H,
        w_qkv=0.05 * jax.random.normal(keys[1], (D, 3 * D), jnp.float32),
        w_attp=0.05 * jax.random.normal(keys[2], (D, D), jnp.float32),
        b_attp=0.01 * jax.random.normal(keys[3], (1, D), jnp.float32),
        w_ff1=0.05 * jax.random.normal(keys[4], (D, Fdim), jnp.float32),
        b_ff1=0.01 * jax.random.normal(keys[5], (1, Fdim), jnp.float32),
        w_ff2=0.05 * jax.random.normal(keys[6], (Fdim, D), jnp.float32),
        b_ff2=0.01 * jax.random.normal(keys[7], (1, D), jnp.float32),
        g1=jnp.ones((1, D), jnp.float32), b1n=jnp.zeros((1, D), jnp.float32),
        g2=jnp.ones((1, D), jnp.float32), b2n=jnp.zeros((1, D), jnp.float32),
    )

    # RoPE tables: freqs_cis shape (seq_len, d_head // 2, 2) = stack(cos, sin)
    d2 = Dh // 2
    inv_freq = 1.0 / (10000.0 ** (jnp.arange(0, d2, dtype=jnp.float32) / d2))
    angles = jnp.arange(S, dtype=jnp.float32)[:, None] * inv_freq[None, :]
    freqs_cis = jnp.stack([jnp.cos(angles), jnp.sin(angles)], axis=-1)

    ref = reference(x, freqs_cis, params)

    # f32 matmul path, 1 batch row per grid step: tight tolerance vs the module math.
    out_f32 = jax.block_until_ready(
        fused_encoder_block(x, freqs_cis, params,
                            matmul_dtype=jnp.float32, batch_block=1))
    np.testing.assert_allclose(np.asarray(out_f32), np.asarray(ref),
                               rtol=1e-4, atol=1e-4)

    # Default fast path: bf16 matmul operands (f32 accumulation), full batch folded
    # into a single grid step.  Looser tolerance.
    out_bf16 = jax.block_until_ready(
        fused_encoder_block(x, freqs_cis, params, batch_block=2))
    np.testing.assert_allclose(np.asarray(out_bf16), np.asarray(ref),
                               rtol=4e-2, atol=4e-2)

    print("KERNEL_OK")
</pallas_src>

<mosaic_0001>
module attributes {stable_mosaic.version = 11 : i64} {
  func.func @_encoder_block_kernel(%arg0: i32, %arg1: memref<1x8x32xf32, #tpu.memory_space<vmem>>, %arg2: memref<8x32xf32, #tpu.memory_space<vmem>>, %arg3: memref<8x32xf32, #tpu.memory_space<vmem>>, %arg4: memref<32x160xf32, #tpu.memory_space<vmem>>, %arg5: memref<32x32xf32, #tpu.memory_space<vmem>>, %arg6: memref<1x32xf32, #tpu.memory_space<vmem>>, %arg7: memref<32x128xf32, #tpu.memory_space<vmem>>, %arg8: memref<1x128xf32, #tpu.memory_space<vmem>>, %arg9: memref<128x32xf32, #tpu.memory_space<vmem>>, %arg10: memref<1x32xf32, #tpu.memory_space<vmem>>, %arg11: memref<1x32xf32, #tpu.memory_space<vmem>>, %arg12: memref<1x32xf32, #tpu.memory_space<vmem>>, %arg13: memref<1x32xf32, #tpu.memory_space<vmem>>, %arg14: memref<1x32xf32, #tpu.memory_space<vmem>>, %arg15: memref<1x8x32xf32, #tpu.memory_space<vmem>>) attributes {dimension_semantics = [#tpu.dimension_semantics<parallel>], iteration_bounds = array<i64: 2>, scalar_prefetch = 0 : i64, scratch_operands = 0 : i64, tpu.core_type = #tpu.core_type<tc>, window_params = [{transform_indices = @transform_0, window_bounds = array<i64: 1, 8, 32>}, {pipeline_mode = #tpu.pipeline_mode<synchronous>, transform_indices = @transform_1, window_bounds = array<i64: 8, 32>}, {pipeline_mode = #tpu.pipeline_mode<synchronous>, transform_indices = @transform_2, window_bounds = array<i64: 8, 32>}, {pipeline_mode = #tpu.pipeline_mode<synchronous>, transform_indices = @transform_3, window_bounds = array<i64: 32, 160>}, {pipeline_mode = #tpu.pipeline_mode<synchronous>, transform_indices = @transform_4, window_bounds = array<i64: 32, 32>}, {pipeline_mode = #tpu.pipeline_mode<synchronous>, transform_indices = @transform_5, window_bounds = array<i64: 1, 32>}, {pipeline_mode = #tpu.pipeline_mode<synchronous>, transform_indices = @transform_6, window_bounds = array<i64: 32, 128>}, {pipeline_mode = #tpu.pipeline_mode<synchronous>, transform_indices = @transform_7, window_bounds = array<i64: 1, 128>}, {pipeline_mode = #tpu.pipeline_mode<synchronous>, transform_indices = @transform_8, window_bounds = array<i64: 128, 32>}, {pipeline_mode = #tpu.pipeline_mode<synchronous>, transform_indices = @transform_9, window_bounds = array<i64: 1, 32>}, {pipeline_mode = #tpu.pipeline_mode<synchronous>, transform_indices = @transform_10, window_bounds = array<i64: 1, 32>}, {pipeline_mode = #tpu.pipeline_mode<synchronous>, transform_indices = @transform_11, window_bounds = array<i64: 1, 32>}, {pipeline_mode = #tpu.pipeline_mode<synchronous>, transform_indices = @transform_12, window_bounds = array<i64: 1, 32>}, {pipeline_mode = #tpu.pipeline_mode<synchronous>, transform_indices = @transform_13, window_bounds = array<i64: 1, 32>}, {transform_indices = @transform_14, window_bounds = array<i64: 1, 8, 32>}]} {
    %c0 = arith.constant 0 : index
    %c0_0 = arith.constant 0 : index
    %c0_1 = arith.constant 0 : index
    %0 = vector.load %arg1[%c0, %c0_0, %c0_1] : memref<1x8x32xf32, #tpu.memory_space<vmem>>, vector<1x8x32xf32>
    %1 = vector.shape_cast %0 : vector<1x8x32xf32> to vector<8x32xf32>
    %c0_2 = arith.constant 0 : index
    %c0_3 = arith.constant 0 : index
    %2 = vector.load %arg11[%c0_2, %c0_3] : memref<1x32xf32, #tpu.memory_space<vmem>>, vector<1x32xf32>
    %c0_4 = arith.constant 0 : index
    %c0_5 = arith.constant 0 : index
    %3 = vector.load %arg12[%c0_4, %c0_5] : memref<1x32xf32, #tpu.memory_space<vmem>>, vector<1x32xf32>
    %cst = arith.constant dense<0.000000e+00> : vector<8xf32>
    %4 = vector.multi_reduction <add>, %1, %cst [1] : vector<8x32xf32> to vector<8xf32>
    %5 = vector.shape_cast %4 : vector<8xf32> to vector<8x1xf32>
    %cst_6 = arith.constant 3.200000e+01 : f32
    %6 = vector.broadcast %cst_6 : f32 to vector<8x1xf32>
    %7 = arith.divf %5, %6 : vector<8x1xf32>
    %8 = vector.broadcast %7 : vector<8x1xf32> to vector<8x32xf32>
    %9 = arith.subf %1, %8 : vector<8x32xf32>
    %10 = vector.broadcast %7 : vector<8x1xf32> to vector<8x32xf32>
    %11 = arith.subf %1, %10 : vector<8x32xf32>
    %12 = arith.mulf %9, %11 : vector<8x32xf32>
    %cst_7 = arith.constant dense<0.000000e+00> : vector<8xf32>
    %13 = vector.multi_reduction <add>, %12, %cst_7 [1] : vector<8x32xf32> to vector<8xf32>
    %14 = vector.shape_cast %13 : vector<8xf32> to vector<8x1xf32>
    %cst_8 = arith.constant 3.200000e+01 : f32
    %15 = vector.broadcast %cst_8 : f32 to vector<8x1xf32>
    %16 = arith.divf %14, %15 : vector<8x1xf32>
    %17 = vector.broadcast %7 : vector<8x1xf32> to vector<8x32xf32>
    %18 = arith.subf %1, %17 : vector<8x32xf32>
    %cst_9 = arith.constant 9.99999974E-6 : f32
    %19 = vector.broadcast %cst_9 : f32 to vector<8x1xf32>
    %20 = arith.addf %16, %19 : vector<8x1xf32>
    %21 = math.rsqrt %20 : vector<8x1xf32>
    %22 = vector.broadcast %21 : vector<8x1xf32> to vector<8x32xf32>
    %23 = arith.mulf %18, %22 : vector<8x32xf32>
    %24 = vector.broadcast %2 : vector<1x32xf32> to vector<8x32xf32>
    %25 = arith.mulf %23, %24 : vector<8x32xf32>
    %26 = vector.broadcast %3 : vector<1x32xf32> to vector<8x32xf32>
    %27 = arith.addf %25, %26 : vector<8x32xf32>
    %c0_10 = arith.constant 0 : index
    %c0_11 = arith.constant 0 : index
    %28 = vector.load %arg4[%c0_10, %c0_11] : memref<32x160xf32, #tpu.memory_space<vmem>>, vector<32x160xf32>
    %cst_12 = arith.constant dense<0.000000e+00> : vector<8x160xf32>
    %29 = tpu.matmul %27, %28, %cst_12 {dimension_numbers = #tpu.dot_dimension_numbers<[1], [0], [0], [1], [0, 0, 1, 1], [], []>} : vector<8x32xf32>, vector<32x160xf32>, vector<8x160xf32> -> vector<8x160xf32>
    %c0_13 = arith.constant 0 : index
    %c0_14 = arith.constant 0 : index
    %30 = vector.load %arg2[%c0_13, %c0_14] : memref<8x32xf32, #tpu.memory_space<vmem>>, vector<8x32xf32>
    %c0_15 = arith.constant 0 : index
    %c0_16 = arith.constant 0 : index
    %31 = vector.load %arg3[%c0_15, %c0_16] : memref<8x32xf32, #tpu.memory_space<vmem>>, vector<8x32xf32>
    %32 = vector.extract_strided_slice %29 {offsets = [0, 0], sizes = [8, 32], strides = [1, 1]} : vector<8x160xf32> to vector<8x32xf32>
    %33 = arith.mulf %32, %30 : vector<8x32xf32>
    %34 = vector.extract_strided_slice %29 {offsets = [0, 32], sizes = [8, 32], strides = [1, 1]} : vector<8x160xf32> to vector<8x32xf32>
    %35 = arith.mulf %34, %31 : vector<8x32xf32>
    %36 = arith.addf %33, %35 : vector<8x32xf32>
    %37 = vector.extract_strided_slice %29 {offsets = [0, 64], sizes = [8, 32], strides = [1, 1]} : vector<8x160xf32> to vector<8x32xf32>
    %38 = arith.mulf %37, %30 : vector<8x32xf32>
    %39 = vector.extract_strided_slice %29 {offsets = [0, 96], sizes = [8, 32], strides = [1, 1]} : vector<8x160xf32> to vector<8x32xf32>
    %40 = arith.mulf %39, %31 : vector<8x32xf32>
    %41 = arith.addf %38, %40 : vector<8x32xf32>
    %42 = vector.extract_strided_slice %29 {offsets = [0, 128], sizes = [8, 32], strides = [1, 1]} : vector<8x160xf32> to vector<8x32xf32>
    %43 = vector.extract_strided_slice %36 {offsets = [0, 0], sizes = [8, 8], strides = [1, 1]} : vector<8x32xf32> to vector<8x8xf32>
    %44 = vector.extract_strided_slice %41 {offsets = [0, 0], sizes = [8, 8], strides = [1, 1]} : vector<8x32xf32> to vector<8x8xf32>
    %45 = vector.extract_strided_slice %42 {offsets = [0, 0], sizes = [8, 8], strides = [1, 1]} : vector<8x32xf32> to vector<8x8xf32>
    %46 = vector.extract_strided_slice %36 {offsets = [0, 8], sizes = [8, 8], strides = [1, 1]} : vector<8x32xf32> to vector<8x8xf32>
    %47 = vector.extract_strided_slice %41 {offsets = [0, 8], sizes = [8, 8], strides = [1, 1]} : vector<8x32xf32> to vector<8x8xf32>
    %48 = vector.extract_strided_slice %42 {offsets = [0, 8], sizes = [8, 8], strides = [1, 1]} : vector<8x32xf32> to vector<8x8xf32>
    %49 = vector.extract_strided_slice %36 {offsets = [0, 16], sizes = [8, 8], strides = [1, 1]} : vector<8x32xf32> to vector<8x8xf32>
    %50 = vector.extract_strided_slice %41 {offsets = [0, 16], sizes = [8, 8], strides = [1, 1]} : vector<8x32xf32> to vector<8x8xf32>
    %51 = vector.extract_strided_slice %42 {offsets = [0, 16], sizes = [8, 8], strides = [1, 1]} : vector<8x32xf32> to vector<8x8xf32>
    %52 = vector.extract_strided_slice %36 {offsets = [0, 24], sizes = [8, 8], strides = [1, 1]} : vector<8x32xf32> to vector<8x8xf32>
    %53 = vector.extract_strided_slice %41 {offsets = [0, 24], sizes = [8, 8], strides = [1, 1]} : vector<8x32xf32> to vector<8x8xf32>
    %54 = vector.extract_strided_slice %42 {offsets = [0, 24], sizes = [8, 8], strides = [1, 1]} : vector<8x32xf32> to vector<8x8xf32>
    %55 = vector.shape_cast %43 : vector<8x8xf32> to vector<1x8x8xf32>
    %56 = vector.shape_cast %46 : vector<8x8xf32> to vector<1x8x8xf32>
    %57 = vector.shape_cast %49 : vector<8x8xf32> to vector<1x8x8xf32>
    %58 = vector.shape_cast %52 : vector<8x8xf32> to vector<1x8x8xf32>
    %59 = tpu.concatenate %55, %56, %57, %58 in 0 : vector<1x8x8xf32>, vector<1x8x8xf32>, vector<1x8x8xf32>, vector<1x8x8xf32> -> vector<4x8x8xf32>
    %60 = vector.shape_cast %44 : vector<8x8xf32> to vector<1x8x8xf32>
    %61 = vector.shape_cast %47 : vector<8x8xf32> to vector<1x8x8xf32>
    %62 = vector.shape_cast %50 : vector<8x8xf32> to vector<1x8x8xf32>
    %63 = vector.shape_cast %53 : vector<8x8xf32> to vector<1x8x8xf32>
    %64 = tpu.concatenate %60, %61, %62, %63 in 0 : vector<1x8x8xf32>, vector<1x8x8xf32>, vector<1x8x8xf32>, vector<1x8x8xf32> -> vector<4x8x8xf32>
    %65 = vector.shape_cast %45 : vector<8x8xf32> to vector<1x8x8xf32>
    %66 = vector.shape_cast %48 : vector<8x8xf32> to vector<1x8x8xf32>
    %67 = vector.shape_cast %51 : vector<8x8xf32> to vector<1x8x8xf32>
    %68 = vector.shape_cast %54 : vector<8x8xf32> to vector<1x8x8xf32>
    %69 = tpu.concatenate %65, %66, %67, %68 in 0 : vector<1x8x8xf32>, vector<1x8x8xf32>, vector<1x8x8xf32>, vector<1x8x8xf32> -> vector<4x8x8xf32>
    %70 = tpu.iota {dimensions = array<i32: 0>} : vector<8x8xi32>
    %71 = tpu.iota {dimensions = array<i32: 1>} : vector<8x8xi32>
    %72 = arith.cmpi sle, %71, %70 : vector<8x8xi32>
    "tpu.trace_start"() <{level = 10 : i32, message = "bqd,bkd->bqk"}> : () -> ()
    %cst_17 = arith.constant dense<0.000000e+00> : vector<4x8x8xf32>
    %73 = tpu.matmul %59, %64, %cst_17 {dimension_numbers = #tpu.dot_dimension_numbers<[2], [2], [1], [1], [0, 0, 0, 1, 1, 1], [0], [0]>} : vector<4x8x8xf32>, vector<4x8x8xf32>, vector<4x8x8xf32> -> vector<4x8x8xf32>
    %cst_18 = arith.constant -1.000000e+30 : f32
    "tpu.trace_stop"() : () -> ()
    %74 = vector.shape_cast %72 : vector<8x8xi1> to vector<1x8x8xi1>
    %75 = vector.broadcast %74 : vector<1x8x8xi1> to vector<4x8x8xi1>
    %76 = vector.broadcast %cst_18 : f32 to vector<4x8x8xf32>
    %77 = arith.select %75, %73, %76 : vector<4x8x8xi1>, vector<4x8x8xf32>
    %cst_19 = arith.constant dense<0xFF800000> : vector<4x8xf32>
    %78 = vector.multi_reduction <maximumf>, %77, %cst_19 [2] : vector<4x8x8xf32> to vector<4x8xf32>
    %79 = vector.shape_cast %78 : vector<4x8xf32> to vector<4x8x1xf32>
    %80 = vector.broadcast %79 : vector<4x8x1xf32> to vector<4x8x8xf32>
    %81 = arith.subf %77, %80 : vector<4x8x8xf32>
    %82 = math.exp %81 : vector<4x8x8xf32>
    %cst_20 = arith.constant dense<0.000000e+00> : vector<4x8xf32>
    %83 = vector.multi_reduction <add>, %82, %cst_20 [2] : vector<4x8x8xf32> to vector<4x8xf32>
    %84 = vector.shape_cast %83 : vector<4x8xf32> to vector<4x8x1xf32>
    "tpu.trace_start"() <{level = 10 : i32, message = "bqk,bkd->bqd"}> : () -> ()
    %cst_21 = arith.constant dense<0.000000e+00> : vector<4x8x8xf32>
    %85 = tpu.matmul %82, %69, %cst_21 {dimension_numbers = #tpu.dot_dimension_numbers<[2], [1], [1], [2], [0, 0, 0, 1, 1, 2], [0], [0]>} : vector<4x8x8xf32>, vector<4x8x8xf32>, vector<4x8x8xf32> -> vector<4x8x8xf32>
    "tpu.trace_stop"() : () -> ()
    %86 = tpu.reciprocal %84 {approx = true} : vector<4x8x1xf32> -> vector<4x8x1xf32>
    %87 = arith.mulf %84, %86 : vector<4x8x1xf32>
    %cst_22 = arith.constant 2.000000e+00 : f32
    %88 = vector.broadcast %cst_22 : f32 to vector<4x8x1xf32>
    %89 = arith.subf %88, %87 : vector<4x8x1xf32>
    %90 = arith.mulf %86, %89 : vector<4x8x1xf32>
    %91 = vector.broadcast %90 : vector<4x8x1xf32> to vector<4x8x8xf32>
    %92 = arith.mulf %85, %91 : vector<4x8x8xf32>
    %93 = vector.extract_strided_slice %92 {offsets = [0, 0, 0], sizes = [1, 8, 8], strides = [1, 1, 1]} : vector<4x8x8xf32> to vector<1x8x8xf32>
    %94 = vector.shape_cast %93 : vector<1x8x8xf32> to vector<8x8xf32>
    %95 = vector.extract_strided_slice %92 {offsets = [1, 0, 0], sizes = [1, 8, 8], strides = [1, 1, 1]} : vector<4x8x8xf32> to vector<1x8x8xf32>
    %96 = vector.shape_cast %95 : vector<1x8x8xf32> to vector<8x8xf32>
    %97 = vector.extract_strided_slice %92 {offsets = [2, 0, 0], sizes = [1, 8, 8], strides = [1, 1, 1]} : vector<4x8x8xf32> to vector<1x8x8xf32>
    %98 = vector.shape_cast %97 : vector<1x8x8xf32> to vector<8x8xf32>
    %99 = vector.extract_strided_slice %92 {offsets = [3, 0, 0], sizes = [1, 8, 8], strides = [1, 1, 1]} : vector<4x8x8xf32> to vector<1x8x8xf32>
    %100 = vector.shape_cast %99 : vector<1x8x8xf32> to vector<8x8xf32>
    %101 = tpu.concatenate %94, %96, %98, %100 in 1 : vector<8x8xf32>, vector<8x8xf32>, vector<8x8xf32>, vector<8x8xf32> -> vector<8x32xf32>
    %c0_23 = arith.constant 0 : index
    %c0_24 = arith.constant 0 : index
    %102 = vector.load %arg5[%c0_23, %c0_24] : memref<32x32xf32, #tpu.memory_space<vmem>>, vector<32x32xf32>
    %cst_25 = arith.constant dense<0.000000e+00> : vector<8x32xf32>
    %103 = tpu.matmul %101, %102, %cst_25 {dimension_numbers = #tpu.dot_dimension_numbers<[1], [0], [0], [1], [0, 0, 1, 1], [], []>} : vector<8x32xf32>, vector<32x32xf32>, vector<8x32xf32> -> vector<8x32xf32>
    %c0_26 = arith.constant 0 : index
    %c0_27 = arith.constant 0 : index
    %104 = vector.load %arg6[%c0_26, %c0_27] : memref<1x32xf32, #tpu.memory_space<vmem>>, vector<1x32xf32>
    %105 = vector.broadcast %104 : vector<1x32xf32> to vector<8x32xf32>
    %106 = arith.addf %103, %105 : vector<8x32xf32>
    %107 = arith.addf %1, %106 : vector<8x32xf32>
    %c0_28 = arith.constant 0 : index
    %c0_29 = arith.constant 0 : index
    %108 = vector.load %arg13[%c0_28, %c0_29] : memref<1x32xf32, #tpu.memory_space<vmem>>, vector<1x32xf32>
    %c0_30 = arith.constant 0 : index
    %c0_31 = arith.constant 0 : index
    %109 = vector.load %arg14[%c0_30, %c0_31] : memref<1x32xf32, #tpu.memory_space<vmem>>, vector<1x32xf32>
    %cst_32 = arith.constant dense<0.000000e+00> : vector<8xf32>
    %110 = vector.multi_reduction <add>, %107, %cst_32 [1] : vector<8x32xf32> to vector<8xf32>
    %111 = vector.shape_cast %110 : vector<8xf32> to vector<8x1xf32>
    %cst_33 = arith.constant 3.200000e+01 : f32
    %112 = vector.broadcast %cst_33 : f32 to vector<8x1xf32>
    %113 = arith.divf %111, %112 : vector<8x1xf32>
    %114 = vector.broadcast %113 : vector<8x1xf32> to vector<8x32xf32>
    %115 = arith.subf %107, %114 : vector<8x32xf32>
    %116 = vector.broadcast %113 : vector<8x1xf32> to vector<8x32xf32>
    %117 = arith.subf %107, %116 : vector<8x32xf32>
    %118 = arith.mulf %115, %117 : vector<8x32xf32>
    %cst_34 = arith.constant dense<0.000000e+00> : vector<8xf32>
    %119 = vector.multi_reduction <add>, %118, %cst_34 [1] : vector<8x32xf32> to vector<8xf32>
    %120 = vector.shape_cast %119 : vector<8xf32> to vector<8x1xf32>
    %cst_35 = arith.constant 3.200000e+01 : f32
    %121 = vector.broadcast %cst_35 : f32 to vector<8x1xf32>
    %122 = arith.divf %120, %121 : vector<8x1xf32>
    %123 = vector.broadcast %113 : vector<8x1xf32> to vector<8x32xf32>
    %124 = arith.subf %107, %123 : vector<8x32xf32>
    %cst_36 = arith.constant 9.99999974E-6 : f32
    %125 = vector.broadcast %cst_36 : f32 to vector<8x1xf32>
    %126 = arith.addf %122, %125 : vector<8x1xf32>
    %127 = math.rsqrt %126 : vector<8x1xf32>
    %128 = vector.broadcast %127 : vector<8x1xf32> to vector<8x32xf32>
    %129 = arith.mulf %124, %128 : vector<8x32xf32>
    %130 = vector.broadcast %108 : vector<1x32xf32> to vector<8x32xf32>
    %131 = arith.mulf %129, %130 : vector<8x32xf32>
    %132 = vector.broadcast %109 : vector<1x32xf32> to vector<8x32xf32>
    %133 = arith.addf %131, %132 : vector<8x32xf32>
    %c0_37 = arith.constant 0 : index
    %c0_38 = arith.constant 0 : index
    %134 = vector.load %arg7[%c0_37, %c0_38] : memref<32x128xf32, #tpu.memory_space<vmem>>, vector<32x128xf32>
    %cst_39 = arith.constant dense<0.000000e+00> : vector<8x128xf32>
    %135 = tpu.matmul %133, %134, %cst_39 {dimension_numbers = #tpu.dot_dimension_numbers<[1], [0], [0], [1], [0, 0, 1, 1], [], []>} : vector<8x32xf32>, vector<32x128xf32>, vector<8x128xf32> -> vector<8x128xf32>
    %c0_40 = arith.constant 0 : index
    %c0_41 = arith.constant 0 : index
    %136 = vector.load %arg8[%c0_40, %c0_41] : memref<1x128xf32, #tpu.memory_space<vmem>>, vector<1x128xf32>
    %137 = vector.broadcast %136 : vector<1x128xf32> to vector<8x128xf32>
    %138 = arith.addf %135, %137 : vector<8x128xf32>
    %cst_42 = arith.constant 0.707106769 : f32
    %139 = vector.broadcast %cst_42 : f32 to vector<8x128xf32>
    %140 = arith.mulf %138, %139 : vector<8x128xf32>
    %141 = math.absf %140 : vector<8x128xf32>
    %cst_43 = arith.constant 0.327591091 : f32
    %142 = vector.broadcast %cst_43 : f32 to vector<8x128xf32>
    %143 = arith.mulf %142, %141 : vector<8x128xf32>
    %cst_44 = arith.constant 1.000000e+00 : f32
    %144 = vector.broadcast %cst_44 : f32 to vector<8x128xf32>
    %145 = arith.addf %144, %143 : vector<8x128xf32>
    %146 = tpu.reciprocal %145 {approx = true} : vector<8x128xf32> -> vector<8x128xf32>
    %147 = arith.mulf %145, %146 : vector<8x128xf32>
    %cst_45 = arith.constant 2.000000e+00 : f32
    %148 = vector.broadcast %cst_45 : f32 to vector<8x128xf32>
    %149 = arith.subf %148, %147 : vector<8x128xf32>
    %150 = arith.mulf %146, %149 : vector<8x128xf32>
    %cst_46 = arith.constant 1.06140542 : f32
    %151 = vector.broadcast %cst_46 : f32 to vector<8x128xf32>
    %152 = arith.mulf %151, %150 : vector<8x128xf32>
    %cst_47 = arith.constant -1.45315206 : f32
    %153 = vector.broadcast %cst_47 : f32 to vector<8x128xf32>
    %154 = arith.addf %152, %153 : vector<8x128xf32>
    %155 = arith.mulf %154, %150 : vector<8x128xf32>
    %cst_48 = arith.constant 1.42141378 : f32
    %156 = vector.broadcast %cst_48 : f32 to vector<8x128xf32>
    %157 = arith.addf %155, %156 : vector<8x128xf32>
    %158 = arith.mulf %157, %150 : vector<8x128xf32>
    %cst_49 = arith.constant -0.284496725 : f32
    %159 = vector.broadcast %cst_49 : f32 to vector<8x128xf32>
    %160 = arith.addf %158, %159 : vector<8x128xf32>
    %161 = arith.mulf %160, %150 : vector<8x128xf32>
    %cst_50 = arith.constant 0.254829586 : f32
    %162 = vector.broadcast %cst_50 : f32 to vector<8x128xf32>
    %163 = arith.addf %161, %162 : vector<8x128xf32>
    %164 = arith.mulf %163, %150 : vector<8x128xf32>
    %cst_51 = arith.constant 0.000000e+00 : f32
    %165 = vector.broadcast %cst_51 : f32 to vector<8x128xf32>
    %166 = arith.subf %165, %140 : vector<8x128xf32>
    %167 = arith.mulf %166, %140 : vector<8x128xf32>
    %168 = math.exp %167 : vector<8x128xf32>
    %169 = arith.mulf %164, %168 : vector<8x128xf32>
    %cst_52 = arith.constant 0.000000e+00 : f32
    %170 = vector.broadcast %cst_52 : f32 to vector<8x128xf32>
    %171 = arith.cmpf oge, %138, %170 : vector<8x128xf32>
    %cst_53 = arith.constant 2.000000e+00 : f32
    %172 = vector.broadcast %cst_53 : f32 to vector<8x128xf32>
    %173 = arith.subf %172, %169 : vector<8x128xf32>
    %174 = arith.select %171, %173, %169 : vector<8x128xi1>, vector<8x128xf32>
    %cst_54 = arith.constant 5.000000e-01 : f32
    %175 = vector.broadcast %cst_54 : f32 to vector<8x128xf32>
    %176 = arith.mulf %175, %138 : vector<8x128xf32>
    %177 = arith.mulf %176, %174 : vector<8x128xf32>
    %c0_55 = arith.constant 0 : index
    %c0_56 = arith.constant 0 : index
    %178 = vector.load %arg9[%c0_55, %c0_56] : memref<128x32xf32, #tpu.memory_space<vmem>>, vector<128x32xf32>
    %cst_57 = arith.constant dense<0.000000e+00> : vector<8x32xf32>
    %179 = tpu.matmul %177, %178, %cst_57 {dimension_numbers = #tpu.dot_dimension_numbers<[1], [0], [0], [1], [0, 0, 1, 1], [], []>} : vector<8x128xf32>, vector<128x32xf32>, vector<8x32xf32> -> vector<8x32xf32>
    %c0_58 = arith.constant 0 : index
    %c0_59 = arith.constant 0 : index
    %180 = vector.load %arg10[%c0_58, %c0_59] : memref<1x32xf32, #tpu.memory_space<vmem>>, vector<1x32xf32>
    %181 = vector.broadcast %180 : vector<1x32xf32> to vector<8x32xf32>
    %182 = arith.addf %179, %181 : vector<8x32xf32>
    %183 = arith.addf %107, %182 : vector<8x32xf32>
    %c0_60 = arith.constant 0 : index
    %c0_61 = arith.constant 0 : index
    %c0_62 = arith.constant 0 : index
    %184 = vector.load %arg15[%c0_60, %c0_61, %c0_62] : memref<1x8x32xf32, #tpu.memory_space<vmem>>, vector<1x8x32xf32>
    %185 = vector.shape_cast %184 : vector<1x8x32xf32> to vector<8x32xf32>
    %186 = vector.shape_cast %183 : vector<8x32xf32> to vector<1x8x32xf32>
    tpu.vector_store %arg15[%c0_60, %c0_61, %c0_62], %186 {strides = array<i32>} : memref<1x8x32xf32, #tpu.memory_space<vmem>>, vector<1x8x32xf32>,
    return
  }
  func.func @transform_0(%arg0: i32) -> (i32, i32, i32) {
    %c0_i32 = arith.constant 0 : i32
    %c0_i32_0 = arith.constant 0 : i32
    %c0_i32_1 = arith.constant 0 : i32
    return %arg0, %c0_i32, %c0_i32_0 : i32, i32, i32
  }
  func.func @transform_1(%arg0: i32) -> (i32, i32) {
    %c0_i32 = arith.constant 0 : i32
    %c0_i32_0 = arith.constant 0 : i32
    %c0_i32_1 = arith.constant 0 : i32
    return %c0_i32, %c0_i32_0 : i32, i32
  }
  func.func @transform_2(%arg0: i32) -> (i32, i32) {
    %c0_i32 = arith.constant 0 : i32
    %c0_i32_0 = arith.constant 0 : i32
    %c0_i32_1 = arith.constant 0 : i32
    return %c0_i32, %c0_i32_0 : i32, i32
  }
  func.func @transform_3(%arg0: i32) -> (i32, i32) {
    %c0_i32 = arith.constant 0 : i32
    %c0_i32_0 = arith.constant 0 : i32
    %c0_i32_1 = arith.constant 0 : i32
    return %c0_i32, %c0_i32_0 : i32, i32
  }
  func.func @transform_4(%arg0: i32) -> (i32, i32) {
    %c0_i32 = arith.constant 0 : i32
    %c0_i32_0 = arith.constant 0 : i32
    %c0_i32_1 = arith.constant 0 : i32
    return %c0_i32, %c0_i32_0 : i32, i32
  }
  func.func @transform_5(%arg0: i32) -> (i32, i32) {
    %c0_i32 = arith.constant 0 : i32
    %c0_i32_0 = arith.constant 0 : i32
    %c0_i32_1 = arith.constant 0 : i32
    return %c0_i32, %c0_i32_0 : i32, i32
  }
  func.func @transform_6(%arg0: i32) -> (i32, i32) {
    %c0_i32 = arith.constant 0 : i32
    %c0_i32_0 = arith.constant 0 : i32
    %c0_i32_1 = arith.constant 0 : i32
    return %c0_i32, %c0_i32_0 : i32, i32
  }
  func.func @transform_7(%arg0: i32) -> (i32, i32) {
    %c0_i32 = arith.constant 0 : i32
    %c0_i32_0 = arith.constant 0 : i32
    %c0_i32_1 = arith.constant 0 : i32
    return %c0_i32, %c0_i32_0 : i32, i32
  }
  func.func @transform_8(%arg0: i32) -> (i32, i32) {
    %c0_i32 = arith.constant 0 : i32
    %c0_i32_0 = arith.constant 0 : i32
    %c0_i32_1 = arith.constant 0 : i32
    return %c0_i32, %c0_i32_0 : i32, i32
  }
  func.func @transform_9(%arg0: i32) -> (i32, i32) {
    %c0_i32 = arith.constant 0 : i32
    %c0_i32_0 = arith.constant 0 : i32
    %c0_i32_1 = arith.constant 0 : i32
    return %c0_i32, %c0_i32_0 : i32, i32
  }
  func.func @transform_10(%arg0: i32) -> (i32, i32) {
    %c0_i32 = arith.constant 0 : i32
    %c0_i32_0 = arith.constant 0 : i32
    %c0_i32_1 = arith.constant 0 : i32
    return %c0_i32, %c0_i32_0 : i32, i32
  }
  func.func @transform_11(%arg0: i32) -> (i32, i32) {
    %c0_i32 = arith.constant 0 : i32
    %c0_i32_0 = arith.constant 0 : i32
    %c0_i32_1 = arith.constant 0 : i32
    return %c0_i32, %c0_i32_0 : i32, i32
  }
  func.func @transform_12(%arg0: i32) -> (i32, i32) {
    %c0_i32 = arith.constant 0 : i32
    %c0_i32_0 = arith.constant 0 : i32
    %c0_i32_1 = arith.constant 0 : i32
    return %c0_i32, %c0_i32_0 : i32, i32
  }
  func.func @transform_13(%arg0: i32) -> (i32, i32) {
    %c0_i32 = arith.constant 0 : i32
    %c0_i32_0 = arith.constant 0 : i32
    %c0_i32_1 = arith.constant 0 : i32
    return %c0_i32, %c0_i32_0 : i32, i32
  }
  func.func @transform_14(%arg0: i32) -> (i32, i32, i32) {
    %c0_i32 = arith.constant 0 : i32
    %c0_i32_0 = arith.constant 0 : i32
    %c0_i32_1 = arith.constant 0 : i32
    return %arg0, %c0_i32, %c0_i32_0 : i32, i32, i32
  }
}

</mosaic_0001>

<llo_original>
// kernel: tpu_custom_call.1
$region0: #{tpu_custom_call.1}
  #allocation0 [shape = 'u32[]', space=smem, size = 0x4, offset = 0x4, fixed_abs, tag = 'smem constant byte address 0x4 - core index']
  #allocation1 [shape = 'u32[72,128]{1,0:T(1,128)}', space=vmem, size = 0x9000, scoped, tag = 'internal scratch']
  %s0 = inlined_call_operand.vmem [shape: f32[2,8,32], index: 0, kind: input, shape index: {}]
  %s1 = inlined_call_operand.vmem [shape: f32[8,32], index: 1, kind: input, shape index: {}]
  %s2 = inlined_call_operand.vmem [shape: f32[8,32], index: 2, kind: input, shape index: {}]
  %s3 = inlined_call_operand.vmem [shape: f32[32,160], index: 3, kind: input, shape index: {}]
  %s4 = inlined_call_operand.vmem [shape: f32[32,32], index: 4, kind: input, shape index: {}]
  %s5 = inlined_call_operand.vmem [shape: f32[1,32], index: 5, kind: input, shape index: {}]
  %s6 = inlined_call_operand.vmem [shape: f32[32,128], index: 6, kind: input, shape index: {}]
  %s7 = inlined_call_operand.vmem [shape: f32[1,128], index: 7, kind: input, shape index: {}]
  %s8 = inlined_call_operand.vmem [shape: f32[128,32], index: 8, kind: input, shape index: {}]
  %s9 = inlined_call_operand.vmem [shape: f32[1,32], index: 9, kind: input, shape index: {}]
  %s10 = inlined_call_operand.vmem [shape: f32[1,32], index: 10, kind: input, shape index: {}]
  %s11 = inlined_call_operand.vmem [shape: f32[1,32], index: 11, kind: input, shape index: {}]
  %s12 = inlined_call_operand.vmem [shape: f32[1,32], index: 12, kind: input, shape index: {}]
  %s13 = inlined_call_operand.vmem [shape: f32[1,32], index: 13, kind: input, shape index: {}]
  %s14 = inlined_call_operand.hbm [shape: f32[2,8,32], index: 14, kind: output, shape index: {}]
  %s15 = sld [smem:[#allocation0]]
  $region89: #{tpu_custom_call.1} parent=0
    _
  %s17 = ssub.s32 1, %s15
  %s18 = scalar_select 0, %s17, %s15
  $region1: #{tpu_custom_call.1} parent=0
    #allocation2 [shape = 'u8[8192]{0}', space=vmem, size = 0x2000, scoped, tag = 'output window, operand 0']
    #allocation3 [shape = 's32[2]{0}', space=sflag, size = 0x8, scoped, tag = 'scoped memory for tpu_custom_call.1']
    %19 = vsyncpa [#allocation3], 0
    %s20 = scalar_lea.sflag [#allocation3], 1
    %21 = vsyncpa %s20, 0
    loop: start=0, step=1, limit=4
    $region2: #{tpu_custom_call.1} parent=1 // loop_pre_header
      _
    $region3: #{tpu_custom_call.1} parent=1 // loop_header
      %s23 = sphi 0, %s27
      %p24 = scmp.ge.s32.totalorder %s23, 4
      %s33 = sphi 0, %s35
      %s36 = sphi 0, %s33
      %s37 = sphi 0, %s36
      %s53 = sphi 0, %s37
      %s57 = sphi 0, %s57
      %s59 = sphi 0, %s57
      %s60 = sphi 0, %s59
      %s74 = sphi 0, %s60
      %s78 = sphi 0, %s78
      %s80 = sphi 0, %s78
      %s81 = sphi 0, %s80
      %s95 = sphi 0, %s81
      %s99 = sphi 0, %s99
      %s101 = sphi 0, %s99
      %s102 = sphi 0, %s101
      %s116 = sphi 0, %s102
      %s120 = sphi 0, %s120
      %s122 = sphi 0, %s120
      %s123 = sphi 0, %s122
      %s137 = sphi 0, %s123
      %s141 = sphi 0, %s141
      %s143 = sphi 0, %s141
      %s144 = sphi 0, %s143
      %s158 = sphi 0, %s144
      %s162 = sphi 0, %s162
      %s164 = sphi 0, %s162
      %s165 = sphi 0, %s164
      %s179 = sphi 0, %s165
      %s183 = sphi 0, %s183
      %s185 = sphi 0, %s183
      %s186 = sphi 0, %s185
      %s200 = sphi 0, %s186
      %s204 = sphi 0, %s204
      %s206 = sphi 0, %s204
      %s207 = sphi 0, %s206
      %s221 = sphi 0, %s207
      %s225 = sphi 0, %s225
      %s227 = sphi 0, %s225
      %s228 = sphi 0, %s227
      %s242 = sphi 0, %s228
      %s246 = sphi 0, %s246
      %s248 = sphi 0, %s246
      %s249 = sphi 0, %s248
      %s263 = sphi 0, %s249
      %s267 = sphi 0, %s267
      %s269 = sphi 0, %s267
      %s270 = sphi 0, %s269
      %s284 = sphi 0, %s270
      %s288 = sphi 0, %s288
      %s290 = sphi 0, %s288
      %s291 = sphi 0, %s290
      %s305 = sphi 0, %s291
      %s309 = sphi 0, %s309
      %s311 = sphi 0, %s309
      %s312 = sphi 0, %s311
      %s326 = sphi 0, %s312
      %s332 = sphi 0, %s334
      %s335 = sphi 0, %s332
      %s336 = sphi 0, %s335
      %s352 = sphi 0, %s336
    $region4: #{tpu_custom_call.1} parent=1 // loop_header_branch
      %26 = sbr.rel (%p24) target = $region8
    $region5: #{tpu_custom_call.1} parent=1 // loop_body
      %s28 = ssub.s32 %s23, 1
      %s29 = ssub.s32 %s23, 2
      %s30 = sadd.s32 %s23, 1
      %s31 = ssub.s32 %s23, %s30
      %p32 = scmp.eq.s32.totalorder %s31, 0
      %s34 = sadd.s32 %s33, 1
      %s35 = scalar_select %p32, %s33, %s34
      %p38 = pneg %p32
      %p39 = scmp.eq.s32.totalorder %s23, 1
      %p40 = por %p38, %p39
      %p41 = scmp.ne.s32.totalorder %s33, %s36
      %p42 = scmp.eq.s32.totalorder %s23, 0
      %p43 = por %p41, %p42
      %p44 = scmp.ne.s32.totalorder %s33, %s36
      %p45 = scmp.eq.s32.totalorder %s28, 1
      %p46 = por %p44, %p45
      %p47 = scmp.ne.s32.totalorder %s36, %s37
      %p48 = scmp.eq.s32.totalorder %s28, 0
      %p49 = por %p47, %p48
      %p50 = scmp.ne.s32.totalorder %s36, %s37
      %p51 = scmp.eq.s32.totalorder %s29, 1
      %p52 = por %p50, %p51
      %p54 = scmp.ne.s32.totalorder %s37, %s53
      %p55 = scmp.eq.s32.totalorder %s29, 0
      %p56 = por %p54, %p55
      %s58 = sadd.s32 %s57, 1
      %p61 = scmp.eq.s32.totalorder %s23, 1
      %p62 = scmp.ne.s32.totalorder %s57, %s59
      %p63 = scmp.eq.s32.totalorder %s23, 0
      %p64 = por %p62, %p63
      %p65 = scmp.ne.s32.totalorder %s57, %s59
      %p66 = scmp.eq.s32.totalorder %s28, 1
      %p67 = por %p65, %p66
      %p68 = scmp.ne.s32.totalorder %s59, %s60
      %p69 = scmp.eq.s32.totalorder %s28, 0
      %p70 = por %p68, %p69
      %p71 = scmp.ne.s32.totalorder %s59, %s60
      %p72 = scmp.eq.s32.totalorder %s29, 1
      %p73 = por %p71, %p72
      %p75 = scmp.ne.s32.totalorder %s60, %s74
      %p76 = scmp.eq.s32.totalorder %s29, 0
      %p77 = por %p75, %p76
      %s79 = sadd.s32 %s78, 1
      %p82 = scmp.eq.s32.totalorder %s23, 1
      %p83 = scmp.ne.s32.totalorder %s78, %s80
      %p84 = scmp.eq.s32.totalorder %s23, 0
      %p85 = por %p83, %p84
      %p86 = scmp.ne.s32.totalorder %s78, %s80
      %p87 = scmp.eq.s32.totalorder %s28, 1
      %p88 = por %p86, %p87
      %p89 = scmp.ne.s32.totalorder %s80, %s81
      %p90 = scmp.eq.s32.totalorder %s28, 0
      %p91 = por %p89, %p90
      %p92 = scmp.ne.s32.totalorder %s80, %s81
      %p93 = scmp.eq.s32.totalorder %s29, 1
      %p94 = por %p92, %p93
      %p96 = scmp.ne.s32.totalorder %s81, %s95
      %p97 = scmp.eq.s32.totalorder %s29, 0
      %p98 = por %p96, %p97
      %s100 = sadd.s32 %s99, 1
      %p103 = scmp.eq.s32.totalorder %s23, 1
      %p104 = scmp.ne.s32.totalorder %s99, %s101
      %p105 = scmp.eq.s32.totalorder %s23, 0
      %p106 = por %p104, %p105
      %p107 = scmp.ne.s32.totalorder %s99, %s101
      %p108 = scmp.eq.s32.totalorder %s28, 1
      %p109 = por %p107, %p108
      %p110 = scmp.ne.s32.totalorder %s101, %s102
      %p111 = scmp.eq.s32.totalorder %s28, 0
      %p112 = por %p110, %p111
      %p113 = scmp.ne.s32.totalorder %s101, %s102
      %p114 = scmp.eq.s32.totalorder %s29, 1
      %p115 = por %p113, %p114
      %p117 = scmp.ne.s32.totalorder %s102, %s116
      %p118 = scmp.eq.s32.totalorder %s29, 0
      %p119 = por %p117, %p118
      %s121 = sadd.s32 %s120, 1
      %p124 = scmp.eq.s32.totalorder %s23, 1
      %p125 = scmp.ne.s32.totalorder %s120, %s122
      %p126 = scmp.eq.s32.totalorder %s23, 0
      %p127 = por %p125, %p126
      %p128 = scmp.ne.s32.totalorder %s120, %s122
      %p129 = scmp.eq.s32.totalorder %s28, 1
      %p130 = por %p128, %p129
      %p131 = scmp.ne.s32.totalorder %s122, %s123
      %p132 = scmp.eq.s32.totalorder %s28, 0
      %p133 = por %p131, %p132
      %p134 = scmp.ne.s32.totalorder %s122, %s123
      %p135 = scmp.eq.s32.totalorder %s29, 1
      %p136 = por %p134, %p135
      %p138 = scmp.ne.s32.totalorder %s123, %s137
      %p139 = scmp.eq.s32.totalorder %s29, 0
      %p140 = por %p138, %p139
      %s142 = sadd.s32 %s141, 1
      %p145 = scmp.eq.s32.totalorder %s23, 1
      %p146 = scmp.ne.s32.totalorder %s141, %s143
      %p147 = scmp.eq.s32.totalorder %s23, 0
      %p148 = por %p146, %p147
      %p149 = scmp.ne.s32.totalorder %s141, %s143
      %p150 = scmp.eq.s32.totalorder %s28, 1
      %p151 = por %p149, %p150
      %p152 = scmp.ne.s32.totalorder %s143, %s144
      %p153 = scmp.eq.s32.totalorder %s28, 0
      %p154 = por %p152, %p153
      %p155 = scmp.ne.s32.totalorder %s143, %s144
      %p156 = scmp.eq.s32.totalorder %s29, 1
      %p157 = por %p155, %p156
      %p159 = scmp.ne.s32.totalorder %s144, %s158
      %p160 = scmp.eq.s32.totalorder %s29, 0
      %p161 = por %p159, %p160
      %s163 = sadd.s32 %s162, 1
      %p166 = scmp.eq.s32.totalorder %s23, 1
      %p167 = scmp.ne.s32.totalorder %s162, %s164
      %p168 = scmp.eq.s32.totalorder %s23, 0
      %p169 = por %p167, %p168
      %p170 = scmp.ne.s32.totalorder %s162, %s164
      %p171 = scmp.eq.s32.totalorder %s28, 1
      %p172 = por %p170, %p171
      %p173 = scmp.ne.s32.totalorder %s164, %s165
      %p174 = scmp.eq.s32.totalorder %s28, 0
      %p175 = por %p173, %p174
      %p176 = scmp.ne.s32.totalorder %s164, %s165
      %p177 = scmp.eq.s32.totalorder %s29, 1
      %p178 = por %p176, %p177
      %p180 = scmp.ne.s32.totalorder %s165, %s179
      %p181 = scmp.eq.s32.totalorder %s29, 0
      %p182 = por %p180, %p181
      %s184 = sadd.s32 %s183, 1
      %p187 = scmp.eq.s32.totalorder %s23, 1
      %p188 = scmp.ne.s32.totalorder %s183, %s185
      %p189 = scmp.eq.s32.totalorder %s23, 0
      %p190 = por %p188, %p189
      %p191 = scmp.ne.s32.totalorder %s183, %s185
      %p192 = scmp.eq.s32.totalorder %s28, 1
      %p193 = por %p191, %p192
      %p194 = scmp.ne.s32.totalorder %s185, %s186
      %p195 = scmp.eq.s32.totalorder %s28, 0
      %p196 = por %p194, %p195
      %p197 = scmp.ne.s32.totalorder %s185, %s186
      %p198 = scmp.eq.s32.totalorder %s29, 1
      %p199 = por %p197, %p198
      %p201 = scmp.ne.s32.totalorder %s186, %s200
      %p202 = scmp.eq.s32.totalorder %s29, 0
      %p203 = por %p201, %p202
      %s205 = sadd.s32 %s204, 1
      %p208 = scmp.eq.s32.totalorder %s23, 1
      %p209 = scmp.ne.s32.totalorder %s204, %s206
      %p210 = scmp.eq.s32.totalorder %s23, 0
      %p211 = por %p209, %p210
      %p212 = scmp.ne.s32.totalorder %s204, %s206
      %p213 = scmp.eq.s32.totalorder %s28, 1
      %p214 = por %p212, %p213
      %p215 = scmp.ne.s32.totalorder %s206, %s207
      %p216 = scmp.eq.s32.totalorder %s28, 0
      %p217 = por %p215, %p216
      %p218 = scmp.ne.s32.totalorder %s206, %s207
      %p219 = scmp.eq.s32.totalorder %s29, 1
      %p220 = por %p218, %p219
      %p222 = scmp.ne.s32.totalorder %s207, %s221
      %p223 = scmp.eq.s32.totalorder %s29, 0
      %p224 = por %p222, %p223
      %s226 = sadd.s32 %s225, 1
      %p229 = scmp.eq.s32.totalorder %s23, 1
      %p230 = scmp.ne.s32.totalorder %s225, %s227
      %p231 = scmp.eq.s32.totalorder %s23, 0
      %p232 = por %p230, %p231
      %p233 = scmp.ne.s32.totalorder %s225, %s227
      %p234 = scmp.eq.s32.totalorder %s28, 1
      %p235 = por %p233, %p234
      %p236 = scmp.ne.s32.totalorder %s227, %s228
      %p237 = scmp.eq.s32.totalorder %s28, 0
      %p238 = por %p236, %p237
      %p239 = scmp.ne.s32.totalorder %s227, %s228
      %p240 = scmp.eq.s32.totalorder %s29, 1
      %p241 = por %p239, %p240
      %p243 = scmp.ne.s32.totalorder %s228, %s242
      %p244 = scmp.eq.s32.totalorder %s29, 0
      %p245 = por %p243, %p244
      %s247 = sadd.s32 %s246, 1
      %p250 = scmp.eq.s32.totalorder %s23, 1
      %p251 = scmp.ne.s32.totalorder %s246, %s248
      %p252 = scmp.eq.s32.totalorder %s23, 0
      %p253 = por %p251, %p252
      %p254 = scmp.ne.s32.totalorder %s246, %s248
      %p255 = scmp.eq.s32.totalorder %s28, 1
      %p256 = por %p254, %p255
      %p257 = scmp.ne.s32.totalorder %s248, %s249
      %p258 = scmp.eq.s32.totalorder %s28, 0
      %p259 = por %p257, %p258
      %p260 = scmp.ne.s32.totalorder %s248, %s249
      %p261 = scmp.eq.s32.totalorder %s29, 1
      %p262 = por %p260, %p261
      %p264 = scmp.ne.s32.totalorder %s249, %s263
      %p265 = scmp.eq.s32.totalorder %s29, 0
      %p266 = por %p264, %p265
      %s268 = sadd.s32 %s267, 1
      %p271 = scmp.eq.s32.totalorder %s23, 1
      %p272 = scmp.ne.s32.totalorder %s267, %s269
      %p273 = scmp.eq.s32.totalorder %s23, 0
      %p274 = por %p272, %p273
      %p275 = scmp.ne.s32.totalorder %s267, %s269
      %p276 = scmp.eq.s32.totalorder %s28, 1
      %p277 = por %p275, %p276
      %p278 = scmp.ne.s32.totalorder %s269, %s270
      %p279 = scmp.eq.s32.totalorder %s28, 0
      %p280 = por %p278, %p279
      %p281 = scmp.ne.s32.totalorder %s269, %s270
      %p282 = scmp.eq.s32.totalorder %s29, 1
      %p283 = por %p281, %p282
      %p285 = scmp.ne.s32.totalorder %s270, %s284
      %p286 = scmp.eq.s32.totalorder %s29, 0
      %p287 = por %p285, %p286
      %s289 = sadd.s32 %s288, 1
      %p292 = scmp.eq.s32.totalorder %s23, 1
      %p293 = scmp.ne.s32.totalorder %s288, %s290
      %p294 = scmp.eq.s32.totalorder %s23, 0
      %p295 = por %p293, %p294
      %p296 = scmp.ne.s32.totalorder %s288, %s290
      %p297 = scmp.eq.s32.totalorder %s28, 1
      %p298 = por %p296, %p297
      %p299 = scmp.ne.s32.totalorder %s290, %s291
      %p300 = scmp.eq.s32.totalorder %s28, 0
      %p301 = por %p299, %p300
      %p302 = scmp.ne.s32.totalorder %s290, %s291
      %p303 = scmp.eq.s32.totalorder %s29, 1
      %p304 = por %p302, %p303
      %p306 = scmp.ne.s32.totalorder %s291, %s305
      %p307 = scmp.eq.s32.totalorder %s29, 0
      %p308 = por %p306, %p307
      %s310 = sadd.s32 %s309, 1
      %p313 = scmp.eq.s32.totalorder %s23, 1
      %p314 = scmp.ne.s32.totalorder %s309, %s311
      %p315 = scmp.eq.s32.totalorder %s23, 0
      %p316 = por %p314, %p315
      %p317 = scmp.ne.s32.totalorder %s309, %s311
      %p318 = scmp.eq.s32.totalorder %s28, 1
      %p319 = por %p317, %p318
      %p320 = scmp.ne.s32.totalorder %s311, %s312
      %p321 = scmp.eq.s32.totalorder %s28, 0
      %p322 = por %p320, %p321
      %p323 = scmp.ne.s32.totalorder %s311, %s312
      %p324 = scmp.eq.s32.totalorder %s29, 1
      %p325 = por %p323, %p324
      %p327 = scmp.ne.s32.totalorder %s312, %s326
      %p328 = scmp.eq.s32.totalorder %s29, 0
      %p329 = por %p327, %p328
      %s330 = ssub.s32 %s23, %s30
      %p331 = scmp.eq.s32.totalorder %s330, 0
      %s333 = sadd.s32 %s332, 1
      %s334 = scalar_select %p331, %s332, %s333
      %p337 = pneg %p331
      %p338 = scmp.eq.s32.totalorder %s23, 1
      %p339 = por %p337, %p338
      %p340 = scmp.ne.s32.totalorder %s332, %s335
      %p341 = scmp.eq.s32.totalorder %s23, 0
      %p342 = por %p340, %p341
      %p343 = scmp.ne.s32.totalorder %s332, %s335
      %p344 = scmp.eq.s32.totalorder %s28, 1
      %p345 = por %p343, %p344
      %p346 = scmp.ne.s32.totalorder %s335, %s336
      %p347 = scmp.eq.s32.totalorder %s28, 0
      %p348 = por %p346, %p347
      %p349 = scmp.ne.s32.totalorder %s335, %s336
      %p350 = scmp.eq.s32.totalorder %s29, 1
      %p351 = por %p349, %p350
      %p353 = scmp.ne.s32.totalorder %s336, %s352
      %p354 = scmp.eq.s32.totalorder %s29, 0
      %p355 = por %p353, %p354
      %p356 = scmp.le.s32.totalorder 1, %s23
      %p357 = scmp.lt.s32.totalorder %s23, 3
      %p358 = pnand %p356, %p357
      %p359 = pneg %p358
      // Predicated region
      $region9: #{tpu_custom_call.1} parent=5 // pred_check
        _
      $region10: #{tpu_custom_call.1} parent=5 // pred_check_branch
        %361 = sbr.rel (%p358) target = $region12
      $region11: #{tpu_custom_call.1} parent=5 // pred_region
        %s362 = ssub.s32 %s23, 1
        // Predicated region
        $region13: #{tpu_custom_call.1} parent=11 // pred_check
          %p363 = pneg %p70
        $region14: #{tpu_custom_call.1} parent=11 // pred_check_branch
          %365 = sbr.rel (%p363) target = $region16
        $region15: #{tpu_custom_call.1} parent=11 // pred_region
          _
        $region16: #{tpu_custom_call.1} parent=11 // pred_fallthru
          _
        // Predicated region
        $region17: #{tpu_custom_call.1} parent=11 // pred_check
          %p366 = pneg %p91
        $region18: #{tpu_custom_call.1} parent=11 // pred_check_branch
          %368 = sbr.rel (%p366) target = $region20
        $region19: #{tpu_custom_call.1} parent=11 // pred_region
          _
        $region20: #{tpu_custom_call.1} parent=11 // pred_fallthru
          _
        // Predicated region
        $region21: #{tpu_custom_call.1} parent=11 // pred_check
          %p369 = pneg %p112
        $region22: #{tpu_custom_call.1} parent=11 // pred_check_branch
          %371 = sbr.rel (%p369) target = $region24
        $region23: #{tpu_custom_call.1} parent=11 // pred_region
          _
        $region24: #{tpu_custom_call.1} parent=11 // pred_fallthru
          _
        // Predicated region
        $region25: #{tpu_custom_call.1} parent=11 // pred_check
          %p372 = pneg %p133
        $region26: #{tpu_custom_call.1} parent=11 // pred_check_branch
          %374 = sbr.rel (%p372) target = $region28
        $region27: #{tpu_custom_call.1} parent=11 // pred_region
          _
        $region28: #{tpu_custom_call.1} parent=11 // pred_fallthru
          _
        // Predicated region
        $region29: #{tpu_custom_call.1} parent=11 // pred_check
          %p375 = pneg %p154
        $region30: #{tpu_custom_call.1} parent=11 // pred_check_branch
          %377 = sbr.rel (%p375) target = $region32
        $region31: #{tpu_custom_call.1} parent=11 // pred_region
          _
        $region32: #{tpu_custom_call.1} parent=11 // pred_fallthru
          _
        // Predicated region
        $region33: #{tpu_custom_call.1} parent=11 // pred_check
          %p378 = pneg %p175
        $region34: #{tpu_custom_call.1} parent=11 // pred_check_branch
          %380 = sbr.rel (%p378) target = $region36
        $region35: #{tpu_custom_call.1} parent=11 // pred_region
          _
        $region36: #{tpu_custom_call.1} parent=11 // pred_fallthru
          _
        // Predicated region
        $region37: #{tpu_custom_call.1} parent=11 // pred_check
          %p381 = pneg %p196
        $region38: #{tpu_custom_call.1} parent=11 // pred_check_branch
          %383 = sbr.rel (%p381) target = $region40
        $region39: #{tpu_custom_call.1} parent=11 // pred_region
          _
        $region40: #{tpu_custom_call.1} parent=11 // pred_fallthru
          _
        // Predicated region
        $region41: #{tpu_custom_call.1} parent=11 // pred_check
          %p384 = pneg %p217
        $region42: #{tpu_custom_call.1} parent=11 // pred_check_branch
          %386 = sbr.rel (%p384) target = $region44
        $region43: #{tpu_custom_call.1} parent=11 // pred_region
          _
        $region44: #{tpu_custom_call.1} parent=11 // pred_fallthru
          _
        // Predicated region
        $region45: #{tpu_custom_call.1} parent=11 // pred_check
          %p387 = pneg %p238
        $region46: #{tpu_custom_call.1} parent=11 // pred_check_branch
          %389 = sbr.rel (%p387) target = $region48
        $region47: #{tpu_custom_call.1} parent=11 // pred_region
          _
        $region48: #{tpu_custom_call.1} parent=11 // pred_fallthru
          _
        // Predicated region
        $region49: #{tpu_custom_call.1} parent=11 // pred_check
          %p390 = pneg %p259
        $region50: #{tpu_custom_call.1} parent=11 // pred_check_branch
          %392 = sbr.rel (%p390) target = $region52
        $region51: #{tpu_custom_call.1} parent=11 // pred_region
          _
        $region52: #{tpu_custom_call.1} parent=11 // pred_fallthru
          _
        // Predicated region
        $region53: #{tpu_custom_call.1} parent=11 // pred_check
          %p393 = pneg %p280
        $region54: #{tpu_custom_call.1} parent=11 // pred_check_branch
          %395 = sbr.rel (%p393) target = $region56
        $region55: #{tpu_custom_call.1} parent=11 // pred_region
          _
        $region56: #{tpu_custom_call.1} parent=11 // pred_fallthru
          _
        // Predicated region
        $region57: #{tpu_custom_call.1} parent=11 // pred_check
          %p396 = pneg %p301
        $region58: #{tpu_custom_call.1} parent=11 // pred_check_branch
          %398 = sbr.rel (%p396) target = $region60
        $region59: #{tpu_custom_call.1} parent=11 // pred_region
          _
        $region60: #{tpu_custom_call.1} parent=11 // pred_fallthru
          _
        // Predicated region
        $region61: #{tpu_custom_call.1} parent=11 // pred_check
          %p399 = pneg %p322
        $region62: #{tpu_custom_call.1} parent=11 // pred_check_branch
          %401 = sbr.rel (%p399) target = $region64
        $region63: #{tpu_custom_call.1} parent=11 // pred_region
          _
        $region64: #{tpu_custom_call.1} parent=11 // pred_fallthru
          _
      $region12: #{tpu_custom_call.1} parent=5 // pred_fallthru
        _
      %p402 = scmp.lt.s32.totalorder %s23, 2
      // Predicated region
      $region65: #{tpu_custom_call.1} parent=5 // pred_check
        %p403 = pneg %p402
      $region66: #{tpu_custom_call.1} parent=5 // pred_check_branch
        %405 = sbr.rel (%p403) target = $region68
      $region67: #{tpu_custom_call.1} parent=5 // pred_region
        // Predicated region
        $region69: #{tpu_custom_call.1} parent=67 // pred_check
          %p406 = pneg %p43
        $region70: #{tpu_custom_call.1} parent=67 // pred_check_branch
          %408 = sbr.rel (%p406) target = $region72
        $region71: #{tpu_custom_call.1} parent=67 // pred_region
          %p409 = scmp.lt.s32.totalorder %s23, 1
          %s410 = scalar_select %p409, %s23, 1
          %s411 = smul.addr %s410, 8
          %s412 = scalar_lea.vmem %s0, %s411
        $region72: #{tpu_custom_call.1} parent=67 // pred_fallthru
          _
      $region68: #{tpu_custom_call.1} parent=5 // pred_fallthru
        _
      %p413 = scmp.le.s32.totalorder 1, %s23
      %p414 = scmp.lt.s32.totalorder %s23, 3
      %p415 = pnand %p413, %p414
      %p416 = pneg %p415
      // Predicated region
      $region73: #{tpu_custom_call.1} parent=5 // pred_check
        _
      $region74: #{tpu_custom_call.1} parent=5 // pred_check_branch
        %418 = sbr.rel (%p415) target = $region76
      $region75: #{tpu_custom_call.1} parent=5 // pred_region
        %s419 = ssub.s32 %s23, 1
        %p420 = scmp.lt.s32.totalorder %s28, 1
        %s421 = scalar_select %p420, %s28, 1
        %s422 = smul.addr %s421, 8
        %s423 = scalar_lea.vmem %s0, %s422
        %p424 = pneg %p49
        %p425 = pneg %p46
        %p426 = pneg %p70
        %p427 = pneg %p67
        %p428 = pneg %p91
        %p429 = pneg %p88
        %p430 = pneg %p112
        %p431 = pneg %p109
        %p432 = pneg %p133
        %p433 = pneg %p130
        %p434 = pneg %p154
        %p435 = pneg %p151
        %p436 = pneg %p175
        %p437 = pneg %p172
        %p438 = pneg %p196
        %p439 = pneg %p193
        %p440 = pneg %p217
        %p441 = pneg %p214
        %p442 = pneg %p238
        %p443 = pneg %p235
        %p444 = pneg %p259
        %p445 = pneg %p256
        %p446 = pneg %p280
        %p447 = pneg %p277
        %p448 = pneg %p301
        %p449 = pneg %p298
        %p450 = pneg %p322
        %p451 = pneg %p319
        %p452 = pneg %p348
        %p453 = pneg %p345
        %s454 = sand.u32 %s335, 1
        %s455 = scalar_lea.sflag [#allocation3], %s454
        %s456 = sand.u32 %s335, 1
        %s457 = smul.addr %s456, 8
        %s458 = scalar_lea.vmem [#allocation2], %s457
        %p459 = scmp.lt.s32.totalorder %s28, 1
        %s460 = scalar_select %p459, %s28, 1
        %s461 = smul.addr %s460, 8
        %s462 = scalar_lea.vmem %s0, %s461
        %v463 = vld [vmem:[%s462] sm:$0xff]
        %v464 = vld [vmem:[%s10] sm:$0x1]
        %v465 = vld [vmem:[%s11] sm:$0x1]
        %vm466 = vcmask 261120
        %v467 = vsel %vm466, %v463, 0.0
        %468 = vadd.xlane.f32.xlu0 %v467
        %v469 = vpop.xlane.xlu0 %468
        %v470 = vrcp.pop 32.0
        %v471 = vmul.f32 32.0, %v470
        %v472 = vsub.f32 1.0, %v471
        %v473 = vmul.f32 %v470, %v472
        %v474 = vadd.f32 %v470, %v473
        %vm475 = vweird.f32 %v470
        %v476 = vsel %vm475, %v470, %v474
        %v477 = vmul.f32 %v469, %v476
        %v478 = vsub.f32 %v463, %v477
        %v479 = vmul.f32 %v478, %v478
        %v480 = vsel %vm466, %v479, 0.0
        %481 = vadd.xlane.f32.xlu0 %v480
        %v482 = vpop.xlane.xlu0 %481
        %v483 = vmul.f32 %v482, %v476
        %v484 = vadd.f32 %v483, 1e-05
        %v485 = vrsqrt.pop %v484
        %v486 = vmul.f32 %v485, %v484
        %v487 = vmul.f32 %v486, %v485
        %v488 = vmul.f32 0.5, %v487
        %v489 = vsub.f32 1.5, %v488
        %v490 = vmul.f32 %v485, %v489
        %vm491 = vweird.f32 %v484
        %vm492 = vweird.f32 %v485
        %vm493 = vmor %vm491, %vm492
        %v494 = vsel %vm493, %v485, %v490
        %v495 = vmul.f32 %v478, %v494
        %v497 = vperm.slane %v464, 0
        %v499 = vmul.f32 %v495, %v497
        %v501 = vperm.slane %v465, 0
        %v503 = vadd.f32 %v499, %v501
        %v504 = vld [vmem:[%s3] sm:$0xff]
        %v505 = vld [vmem:[%s3 + $0x8] sm:$0xff]
        %v506 = vld [vmem:[%s3 + $0x10] sm:$0xff]
        %v507 = vld [vmem:[%s3 + $0x18] sm:$0xff]
        %v508 = vld [vmem:[%s3 + $0x20] sm:$0xff]
        %v509 = vld [vmem:[%s3 + $0x28] sm:$0xff]
        %v510 = vld [vmem:[%s3 + $0x30] sm:$0xff]
        %v511 = vld [vmem:[%s3 + $0x38] sm:$0xff]
        %v513 = vsel %vm466, %v503, 0
        %515 = vmatpush.msra.mxu0 0.0
        %516 = vmatpush.msra.mxu0 0.0
        %517 = vmatpush.msra.mxu0 0.0
        %518 = vmatpush.msra.mxu0 0.0
        %519 = vmatpush.msra.mxu0 0.0
        %520 = vmatpush.msra.mxu0 0.0
        %521 = vmatpush.msra.mxu0 0.0
        %522 = vmatpush.msra.mxu0 0.0
        %523 = vmatpush.msra.mxu0 0.0
        %524 = vmatpush.msra.mxu0 0.0
        %525 = vmatpush.msra.mxu0 0.0
        %526 = vmatpush.msra.mxu0 0.0
        %527 = vmatpush.msra.mxu0 %v510
        %528 = vmatpush.msra.mxu0 %v508
        %529 = vmatpush.msra.mxu0 %v506
        %530 = vmatpush.msra.mxu0 %v504
        %531 = vmatmul.f32.gmra.mxu0 %v513
        %v532 = vpop.f32.mrf.mxu0
        %v533 = vadd.f32 0.0, %v532
        %534 = vdwg.mxu0
        %535 = vmatpush.msra.mxu0 0.0
        %536 = vmatpush.msra.mxu0 0.0
        %537 = vmatpush.msra.mxu0 0.0
        %538 = vmatpush.msra.mxu0 0.0
        %539 = vmatpush.msra.mxu0 0.0
        %540 = vmatpush.msra.mxu0 0.0
        %541 = vmatpush.msra.mxu0 0.0
        %542 = vmatpush.msra.mxu0 0.0
        %543 = vmatpush.msra.mxu0 0.0
        %544 = vmatpush.msra.mxu0 0.0
        %545 = vmatpush.msra.mxu0 0.0
        %546 = vmatpush.msra.mxu0 0.0
        %547 = vmatpush.msra.mxu0 %v511
        %548 = vmatpush.msra.mxu0 %v509
        %549 = vmatpush.msra.mxu0 %v507
        %550 = vmatpush.msra.mxu0 %v505
        %551 = vmatmul.f32.gmra.mxu0 %v513
        %v552 = vpop.f32.mrf.mxu0
        %v553 = vadd.f32 0.0, %v552
        %554 = vdwg.mxu0
        %v555 = vld [vmem:[%s1] sm:$0xff]
        %v556 = vld [vmem:[%s2] sm:$0xff]
        %v557 = vmul.f32 %v533, %v555
        %559 = vrot.lane.b32.xlu0 %v556, 32
        %v560 = vpop.permute.xlu0 %559
        %v562 = vmul.f32 %v533, %v560
        %564 = vrot.lane.b32.xlu0 %v562, 96
        %v565 = vpop.permute.xlu0 %564
        %v567 = vadd.f32 %v557, %v565
        %569 = vrot.lane.b32.xlu0 %v555, 64
        %v570 = vpop.permute.xlu0 %569
        %v572 = vmul.f32 %v533, %v570
        %573 = vrot.lane.b32.xlu0 %v556, 96
        %v574 = vpop.permute.xlu0 %573
        %v576 = vmul.f32 %v533, %v574
        %578 = vrot.lane.b32.xlu0 %v576, 96
        %v579 = vpop.permute.xlu0 %578
        %v581 = vadd.f32 %v572, %v579
        %583 = vrot.lane.b32.xlu0 %v567, 120
        %v584 = vpop.permute.xlu0 %583
        %585 = vrot.lane.b32.xlu0 %v567, 112
        %v586 = vpop.permute.xlu0 %585
        %587 = vrot.lane.b32.xlu0 %v567, 104
        %v588 = vpop.permute.xlu0 %587
        %590 = vrot.lane.b32.xlu0 %v581, 120
        %v591 = vpop.permute.xlu0 %590
        %592 = vrot.lane.b32.xlu0 %v581, 112
        %v593 = vpop.permute.xlu0 %592
        %594 = vrot.lane.b32.xlu0 %v581, 104
        %v595 = vpop.permute.xlu0 %594
        %597 = vrot.lane.b32.xlu0 %v553, 120
        %v598 = vpop.permute.xlu0 %597
        %600 = vrot.lane.b32.xlu0 %v553, 112
        %v601 = vpop.permute.xlu0 %600
        %603 = vrot.lane.b32.xlu0 %v553, 104
        %v604 = vpop.permute.xlu0 %603
        %v606 = vlaneseq
        %v607 = vshrl.u32 %v606, 7
        %v608 = vlaneseq
        %v609 = vand.u32 %v608, 127
        %vm610 = vcmp.le.s32.totalorder %v609, %v607
        %611 = vrot.lane.b32.xlu0 %v581, 64
        %v612 = vpop.permute.xlu0 %611
        %vm613 = vcmask 64512
        %v614 = vsel %vm613, %v567, 0
        %v616 = vsel %vm613, %v612, 0
        %618 = vmatpush.xpose.msra.mxu0 0.0
        %619 = vmatpush.xpose.msra.mxu0 0.0
        %620 = vmatpush.xpose.msra.mxu0 0.0
        %621 = vmatpush.xpose.msra.mxu0 0.0
        %622 = vmatpush.xpose.msra.mxu0 0.0
        %623 = vmatpush.xpose.msra.mxu0 0.0
        %624 = vmatpush.xpose.msra.mxu0 0.0
        %625 = vmatpush.xpose.msra.mxu0 0.0
        %626 = vmatpush.xpose.msra.mxu0 0.0
        %627 = vmatpush.xpose.msra.mxu0 0.0
        %628 = vmatpush.xpose.msra.mxu0 0.0
        %629 = vmatpush.xpose.msra.mxu0 0.0
        %630 = vmatpush.xpose.msra.mxu0 0.0
        %631 = vmatpush.xpose.msra.mxu0 0.0
        %632 = vmatpush.xpose.msra.mxu0 0.0
        %633 = vmatpush.xpose.msra.mxu0 %v616
        %634 = vmatmul.f32.gmra.mxu0 %v614
        %v635 = vpop.f32.mrf.mxu0
        %v636 = vadd.f32 0.0, %v635
        %637 = vdwg.mxu0
        %638 = vrot.lane.b32.xlu0 %v591, 64
        %v639 = vpop.permute.xlu0 %638
        %v640 = vsel %vm613, %v584, 0
        %v642 = vsel %vm613, %v639, 0
        %644 = vmatpush.xpose.msra.mxu0 0.0
        %645 = vmatpush.xpose.msra.mxu0 0.0
        %646 = vmatpush.xpose.msra.mxu0 0.0
        %647 = vmatpush.xpose.msra.mxu0 0.0
        %648 = vmatpush.xpose.msra.mxu0 0.0
        %649 = vmatpush.xpose.msra.mxu0 0.0
        %650 = vmatpush.xpose.msra.mxu0 0.0
        %651 = vmatpush.xpose.msra.mxu0 0.0
        %652 = vmatpush.xpose.msra.mxu0 0.0
        %653 = vmatpush.xpose.msra.mxu0 0.0
        %654 = vmatpush.xpose.msra.mxu0 0.0
        %655 = vmatpush.xpose.msra.mxu0 0.0
        %656 = vmatpush.xpose.msra.mxu0 0.0
        %657 = vmatpush.xpose.msra.mxu0 0.0
        %658 = vmatpush.xpose.msra.mxu0 0.0
        %659 = vmatpush.xpose.msra.mxu0 %v642
        %660 = vmatmul.f32.gmra.mxu0 %v640
        %v661 = vpop.f32.mrf.mxu0
        %v662 = vadd.f32 0.0, %v661
        %663 = vdwg.mxu0
        %664 = vrot.lane.b32.xlu0 %v593, 64
        %v665 = vpop.permute.xlu0 %664
        %v666 = vsel %vm613, %v586, 0
        %v668 = vsel %vm613, %v665, 0
        %670 = vmatpush.xpose.msra.mxu0 0.0
        %671 = vmatpush.xpose.msra.mxu0 0.0
        %672 = vmatpush.xpose.msra.mxu0 0.0
        %673 = vmatpush.xpose.msra.mxu0 0.0
        %674 = vmatpush.xpose.msra.mxu0 0.0
        %675 = vmatpush.xpose.msra.mxu0 0.0
        %676 = vmatpush.xpose.msra.mxu0 0.0
        %677 = vmatpush.xpose.msra.mxu0 0.0
        %678 = vmatpush.xpose.msra.mxu0 0.0
        %679 = vmatpush.xpose.msra.mxu0 0.0
        %680 = vmatpush.xpose.msra.mxu0 0.0
        %681 = vmatpush.xpose.msra.mxu0 0.0
        %682 = vmatpush.xpose.msra.mxu0 0.0
        %683 = vmatpush.xpose.msra.mxu0 0.0
        %684 = vmatpush.xpose.msra.mxu0 0.0
        %685 = vmatpush.xpose.msra.mxu0 %v668
        %686 = vmatmul.f32.gmra.mxu0 %v666
        %v687 = vpop.f32.mrf.mxu0
        %v688 = vadd.f32 0.0, %v687
        %689 = vdwg.mxu0
        %690 = vrot.lane.b32.xlu0 %v595, 64
        %v691 = vpop.permute.xlu0 %690
        %v692 = vsel %vm613, %v588, 0
        %v694 = vsel %vm613, %v691, 0
        %696 = vmatpush.xpose.msra.mxu0 0.0
        %697 = vmatpush.xpose.msra.mxu0 0.0
        %698 = vmatpush.xpose.msra.mxu0 0.0
        %699 = vmatpush.xpose.msra.mxu0 0.0
        %700 = vmatpush.xpose.msra.mxu0 0.0
        %701 = vmatpush.xpose.msra.mxu0 0.0
        %702 = vmatpush.xpose.msra.mxu0 0.0
        %703 = vmatpush.xpose.msra.mxu0 0.0
        %704 = vmatpush.xpose.msra.mxu0 0.0
        %705 = vmatpush.xpose.msra.mxu0 0.0
        %706 = vmatpush.xpose.msra.mxu0 0.0
        %707 = vmatpush.xpose.msra.mxu0 0.0
        %708 = vmatpush.xpose.msra.mxu0 0.0
        %709 = vmatpush.xpose.msra.mxu0 0.0
        %710 = vmatpush.xpose.msra.mxu0 0.0
        %711 = vmatpush.xpose.msra.mxu0 %v694
        %712 = vmatmul.f32.gmra.mxu0 %v692
        %v713 = vpop.f32.mrf.mxu0
        %v714 = vadd.f32 0.0, %v713
        %715 = vdwg.mxu0
        %v716 = vsel %vm610, 1, 0
        %vm717 = vcmp.eq.s32.totalorder %v716, 1
        %v718 = vsel %vm717, %v636, -1e+30
        %v719 = vsel %vm717, %v662, -1e+30
        %v720 = vsel %vm717, %v688, -1e+30
        %v721 = vsel %vm717, %v714, -1e+30
        %v722 = vsel %vm613, %v718, -inf
        %723 = vmax.xlane.f32.xlu0 %v722
        %v724 = vpop.xlane.xlu0 %723
        %v725 = vsel %vm613, %v719, -inf
        %726 = vmax.xlane.f32.xlu0 %v725
        %v727 = vpop.xlane.xlu0 %726
        %v728 = vsel %vm613, %v720, -inf
        %729 = vmax.xlane.f32.xlu0 %v728
        %v730 = vpop.xlane.xlu0 %729
        %v731 = vsel %vm613, %v721, -inf
        %732 = vmax.xlane.f32.xlu0 %v731
        %v733 = vpop.xlane.xlu0 %732
        %v734 = vsub.f32 %v718, %v724
        %v735 = vsub.f32 %v719, %v727
        %v736 = vsub.f32 %v720, %v730
        %v737 = vsub.f32 %v721, %v733
        %v738 = vmul.f32 %v734, 1.442695
        %v739 = vpow.pop %v738
        %v740 = vmul.f32 %v735, 1.442695
        %v741 = vpow.pop %v740
        %v742 = vmul.f32 %v736, 1.442695
        %v743 = vpow.pop %v742
        %v744 = vmul.f32 %v737, 1.442695
        %v745 = vpow.pop %v744
        %v746 = vsel %vm613, %v739, 0.0
        %747 = vadd.xlane.f32.xlu0 %v746
        %v748 = vpop.xlane.xlu0 %747
        %v749 = vsel %vm613, %v741, 0.0
        %750 = vadd.xlane.f32.xlu0 %v749
        %v751 = vpop.xlane.xlu0 %750
        %v752 = vsel %vm613, %v743, 0.0
        %753 = vadd.xlane.f32.xlu0 %v752
        %v754 = vpop.xlane.xlu0 %753
        %v755 = vsel %vm613, %v745, 0.0
        %756 = vadd.xlane.f32.xlu0 %v755
        %v757 = vpop.xlane.xlu0 %756
        %v759 = vsel %vm613, %v739, 0
        %761 = vmatpush.msra.mxu0 0.0
        %762 = vmatpush.msra.mxu0 0.0
        %763 = vmatpush.msra.mxu0 0.0
        %764 = vmatpush.msra.mxu0 0.0
        %765 = vmatpush.msra.mxu0 0.0
        %766 = vmatpush.msra.mxu0 0.0
        %767 = vmatpush.msra.mxu0 0.0
        %768 = vmatpush.msra.mxu0 0.0
        %769 = vmatpush.msra.mxu0 0.0
        %770 = vmatpush.msra.mxu0 0.0
        %771 = vmatpush.msra.mxu0 0.0
        %772 = vmatpush.msra.mxu0 0.0
        %773 = vmatpush.msra.mxu0 0.0
        %774 = vmatpush.msra.mxu0 0.0
        %775 = vmatpush.msra.mxu0 0.0
        %776 = vmatpush.msra.mxu0 %v553
        %777 = vmatmul.f32.gmra.mxu0 %v759
        %v778 = vpop.f32.mrf.mxu0
        %v779 = vadd.f32 0.0, %v778
        %780 = vdwg.mxu0
        %v782 = vsel %vm613, %v741, 0
        %784 = vmatpush.msra.mxu0 0.0
        %785 = vmatpush.msra.mxu0 0.0
        %786 = vmatpush.msra.mxu0 0.0
        %787 = vmatpush.msra.mxu0 0.0
        %788 = vmatpush.msra.mxu0 0.0
        %789 = vmatpush.msra.mxu0 0.0
        %790 = vmatpush.msra.mxu0 0.0
        %791 = vmatpush.msra.mxu0 0.0
        %792 = vmatpush.msra.mxu0 0.0
        %793 = vmatpush.msra.mxu0 0.0
        %794 = vmatpush.msra.mxu0 0.0
        %795 = vmatpush.msra.mxu0 0.0
        %796 = vmatpush.msra.mxu0 0.0
        %797 = vmatpush.msra.mxu0 0.0
        %798 = vmatpush.msra.mxu0 0.0
        %799 = vmatpush.msra.mxu0 %v598
        %800 = vmatmul.f32.gmra.mxu0 %v782
        %v801 = vpop.f32.mrf.mxu0
        %v802 = vadd.f32 0.0, %v801
        %803 = vdwg.mxu0
        %v805 = vsel %vm613, %v743, 0
        %807 = vmatpush.msra.mxu0 0.0
        %808 = vmatpush.msra.mxu0 0.0
        %809 = vmatpush.msra.mxu0 0.0
        %810 = vmatpush.msra.mxu0 0.0
        %811 = vmatpush.msra.mxu0 0.0
        %812 = vmatpush.msra.mxu0 0.0
        %813 = vmatpush.msra.mxu0 0.0
        %814 = vmatpush.msra.mxu0 0.0
        %815 = vmatpush.msra.mxu0 0.0
        %816 = vmatpush.msra.mxu0 0.0
        %817 = vmatpush.msra.mxu0 0.0
        %818 = vmatpush.msra.mxu0 0.0
        %819 = vmatpush.msra.mxu0 0.0
        %820 = vmatpush.msra.mxu0 0.0
        %821 = vmatpush.msra.mxu0 0.0
        %822 = vmatpush.msra.mxu0 %v601
        %823 = vmatmul.f32.gmra.mxu0 %v805
        %v824 = vpop.f32.mrf.mxu0
        %v825 = vadd.f32 0.0, %v824
        %826 = vdwg.mxu0
        %v828 = vsel %vm613, %v745, 0
        %830 = vmatpush.msra.mxu0 0.0
        %831 = vmatpush.msra.mxu0 0.0
        %832 = vmatpush.msra.mxu0 0.0
        %833 = vmatpush.msra.mxu0 0.0
        %834 = vmatpush.msra.mxu0 0.0
        %835 = vmatpush.msra.mxu0 0.0
        %836 = vmatpush.msra.mxu0 0.0
        %837 = vmatpush.msra.mxu0 0.0
        %838 = vmatpush.msra.mxu0 0.0
        %839 = vmatpush.msra.mxu0 0.0
        %840 = vmatpush.msra.mxu0 0.0
        %841 = vmatpush.msra.mxu0 0.0
        %842 = vmatpush.msra.mxu0 0.0
        %843 = vmatpush.msra.mxu0 0.0
        %844 = vmatpush.msra.mxu0 0.0
        %845 = vmatpush.msra.mxu0 %v604
        %846 = vmatmul.f32.gmra.mxu0 %v828
        %v847 = vpop.f32.mrf.mxu0
        %v848 = vadd.f32 0.0, %v847
        %849 = vdwg.mxu0
        %v850 = vrcp.pop %v748
        %v851 = vrcp.pop %v751
        %v852 = vrcp.pop %v754
        %v853 = vrcp.pop %v757
        %v854 = vmul.f32 %v748, %v850
        %v855 = vmul.f32 %v751, %v851
        %v856 = vmul.f32 %v754, %v852
        %v857 = vmul.f32 %v757, %v853
        %v858 = vsub.f32 2.0, %v854
        %v859 = vsub.f32 2.0, %v855
        %v860 = vsub.f32 2.0, %v856
        %v861 = vsub.f32 2.0, %v857
        %v862 = vmul.f32 %v850, %v858
        %v863 = vmul.f32 %v851, %v859
        %v864 = vmul.f32 %v852, %v860
        %v865 = vmul.f32 %v853, %v861
        %v866 = vmul.f32 %v779, %v862
        %v867 = vmul.f32 %v802, %v863
        %v868 = vmul.f32 %v825, %v864
        %v869 = vmul.f32 %v848, %v865
        %871 = vrot.lane.b32.xlu0 %v867, 8
        %v872 = vpop.permute.xlu0 %871
        %875 = vrot.lane.b32.xlu0 %v868, 16
        %v876 = vpop.permute.xlu0 %875
        %879 = vrot.lane.b32.xlu0 %v869, 24
        %v880 = vpop.permute.xlu0 %879
        %v882 = vsel %vm613, %v866, %v872
        %vm883 = vcmask 130048
        %v884 = vsel %vm883, %v882, %v876
        %vm885 = vcmask 195584
        %v886 = vsel %vm885, %v884, %v880
        %v887 = vld [vmem:[%s4] sm:$0xff]
        %v888 = vld [vmem:[%s4 + $0x8] sm:$0xff]
        %v889 = vld [vmem:[%s4 + $0x10] sm:$0xff]
        %v890 = vld [vmem:[%s4 + $0x18] sm:$0xff]
        %v891 = vld [vmem:[%s5] sm:$0x1]
        %v893 = vperm.slane %v891, 0
        %v896 = vsel %vm466, %v886, 0
        %898 = vmatpush.msra.mxu0 0.0
        %899 = vmatpush.msra.mxu0 0.0
        %900 = vmatpush.msra.mxu0 0.0
        %901 = vmatpush.msra.mxu0 0.0
        %902 = vmatpush.msra.mxu0 0.0
        %903 = vmatpush.msra.mxu0 0.0
        %904 = vmatpush.msra.mxu0 0.0
        %905 = vmatpush.msra.mxu0 0.0
        %906 = vmatpush.msra.mxu0 0.0
        %907 = vmatpush.msra.mxu0 0.0
        %908 = vmatpush.msra.mxu0 0.0
        %909 = vmatpush.msra.mxu0 0.0
        %910 = vmatpush.msra.mxu0 %v890
        %911 = vmatpush.msra.mxu0 %v889
        %912 = vmatpush.msra.mxu0 %v888
        %913 = vmatpush.msra.mxu0 %v887
        %914 = vmatmul.f32.gmra.mxu0 %v896
        %v915 = vpop.f32.mrf.mxu0
        %v916 = vadd.f32 %v893, %v915
        %917 = vdwg.mxu0
        %v918 = vadd.f32 %v463, %v916
        %v919 = vld [vmem:[%s12] sm:$0x1]
        %v920 = vld [vmem:[%s13] sm:$0x1]
        %v921 = vsel %vm466, %v918, 0.0
        %922 = vadd.xlane.f32.xlu0 %v921
        %v923 = vpop.xlane.xlu0 %922
        %v924 = vmul.f32 %v923, %v476
        %v925 = vsub.f32 %v918, %v924
        %v926 = vmul.f32 %v925, %v925
        %v927 = vsel %vm466, %v926, 0.0
        %928 = vadd.xlane.f32.xlu0 %v927
        %v929 = vpop.xlane.xlu0 %928
        %v930 = vmul.f32 %v929, %v476
        %v931 = vadd.f32 %v930, 1e-05
        %v932 = vrsqrt.pop %v931
        %v933 = vmul.f32 %v932, %v931
        %v934 = vmul.f32 %v933, %v932
        %v935 = vmul.f32 0.5, %v934
        %v936 = vsub.f32 1.5, %v935
        %v937 = vmul.f32 %v932, %v936
        %vm938 = vweird.f32 %v931
        %vm939 = vweird.f32 %v932
        %vm940 = vmor %vm938, %vm939
        %v941 = vsel %vm940, %v932, %v937
        %v942 = vmul.f32 %v925, %v941
        %v944 = vperm.slane %v919, 0
        %v946 = vmul.f32 %v942, %v944
        %v948 = vperm.slane %v920, 0
        %v950 = vadd.f32 %v946, %v948
        %v951 = vld [vmem:[%s6] sm:$0xff]
        %v952 = vld [vmem:[%s6 + $0x8] sm:$0xff]
        %v953 = vld [vmem:[%s6 + $0x10] sm:$0xff]
        %v954 = vld [vmem:[%s6 + $0x18] sm:$0xff]
        %v955 = vld [vmem:[%s7] sm:$0x1]
        %v957 = vperm.slane %v955, 0
        %v960 = vsel %vm466, %v950, 0
        %962 = vmatpush.msra.mxu0 0.0
        %963 = vmatpush.msra.mxu0 0.0
        %964 = vmatpush.msra.mxu0 0.0
        %965 = vmatpush.msra.mxu0 0.0
        %966 = vmatpush.msra.mxu0 0.0
        %967 = vmatpush.msra.mxu0 0.0
        %968 = vmatpush.msra.mxu0 0.0
        %969 = vmatpush.msra.mxu0 0.0
        %970 = vmatpush.msra.mxu0 0.0
        %971 = vmatpush.msra.mxu0 0.0
        %972 = vmatpush.msra.mxu0 0.0
        %973 = vmatpush.msra.mxu0 0.0
        %974 = vmatpush.msra.mxu0 %v954
        %975 = vmatpush.msra.mxu0 %v953
        %976 = vmatpush.msra.mxu0 %v952
        %977 = vmatpush.msra.mxu0 %v951
        %978 = vmatmul.f32.gmra.mxu0 %v960
        %v979 = vpop.f32.mrf.mxu0
        %v980 = vadd.f32 %v957, %v979
        %981 = vdwg.mxu0
        %v982 = vmul.f32 %v980, 0.70710677
        %v983 = vand.u32 2147483647, %v982
        %v984 = vmul.f32 %v983, 0.3275911
        %v985 = vadd.f32 %v984, 1.0
        %v986 = vrcp.pop %v985
        %v987 = vmul.f32 %v985, %v986
        %v988 = vsub.f32 2.0, %v987
        %v989 = vmul.f32 %v986, %v988
        %v990 = vmul.f32 %v989, 1.0614054
        %v991 = vadd.f32 %v990, -1.4531521
        %v992 = vmul.f32 %v991, %v989
        %v993 = vadd.f32 %v992, 1.4214138
        %v994 = vmul.f32 %v993, %v989
        %v995 = vadd.f32 %v994, -0.28449672
        %v996 = vmul.f32 %v995, %v989
        %v997 = vadd.f32 %v996, 0.2548296
        %v998 = vmul.f32 %v997, %v989
        %v999 = vsub.f32 0.0, %v982
        %v1000 = vmul.f32 %v999, %v982
        %v1001 = vmul.f32 %v1000, 1.442695
        %v1002 = vpow.pop %v1001
        %v1003 = vmul.f32 %v998, %v1002
        %vm1004 = vcmp.ge.f32.partialorder %v980, 0.0
        %v1005 = vsub.f32 2.0, %v1003
        %v1006 = vsel %vm1004, %v1005, %v1003
        %v1007 = vmul.f32 %v980, 0.5
        %v1008 = vmul.f32 %v1007, %v1006
        %v1009 = vld [vmem:[%s8] sm:$0xff]
        %v1010 = vld [vmem:[%s8 + $0x8] sm:$0xff]
        %v1011 = vld [vmem:[%s8 + $0x10] sm:$0xff]
        %v1012 = vld [vmem:[%s8 + $0x18] sm:$0xff]
        %v1013 = vld [vmem:[%s8 + $0x20] sm:$0xff]
        %v1014 = vld [vmem:[%s8 + $0x28] sm:$0xff]
        %v1015 = vld [vmem:[%s8 + $0x30] sm:$0xff]
        %v1016 = vld [vmem:[%s8 + $0x38] sm:$0xff]
        %v1017 = vld [vmem:[%s8 + $0x40] sm:$0xff]
        %v1018 = vld [vmem:[%s8 + $0x48] sm:$0xff]
        %v1019 = vld [vmem:[%s8 + $0x50] sm:$0xff]
        %v1020 = vld [vmem:[%s8 + $0x58] sm:$0xff]
        %v1021 = vld [vmem:[%s8 + $0x60] sm:$0xff]
        %v1022 = vld [vmem:[%s8 + $0x68] sm:$0xff]
        %v1023 = vld [vmem:[%s8 + $0x70] sm:$0xff]
        %v1024 = vld [vmem:[%s8 + $0x78] sm:$0xff]
        %v1025 = vld [vmem:[%s9] sm:$0x1]
        %v1027 = vperm.slane %v1025, 0
        %1029 = vmatpush.msra.mxu0 %v1024
        %1030 = vmatpush.msra.mxu0 %v1023
        %1031 = vmatpush.msra.mxu0 %v1022
        %1032 = vmatpush.msra.mxu0 %v1021
        %1033 = vmatpush.msra.mxu0 %v1020
        %1034 = vmatpush.msra.mxu0 %v1019
        %1035 = vmatpush.msra.mxu0 %v1018
        %1036 = vmatpush.msra.mxu0 %v1017
        %1037 = vmatpush.msra.mxu0 %v1016
        %1038 = vmatpush.msra.mxu0 %v1015
        %1039 = vmatpush.msra.mxu0 %v1014
        %1040 = vmatpush.msra.mxu0 %v1013
        %1041 = vmatpush.msra.mxu0 %v1012
        %1042 = vmatpush.msra.mxu0 %v1011
        %1043 = vmatpush.msra.mxu0 %v1010
        %1044 = vmatpush.msra.mxu0 %v1009
        %1045 = vmatmul.f32.gmra.mxu0 %v1008
        %v1046 = vpop.f32.mrf.mxu0
        %v1047 = vadd.f32 %v1027, %v1046
        %1048 = vdwg.mxu0
        %v1049 = vadd.f32 %v918, %v1047
        %1050 = vst.msk [vmem:[%s458] sm:$0xff] %vm466, %v1049
        %s1051 = sand.u32 %s335, 1
        %s1052 = scalar_lea.sflag [#allocation3], %s1051
        %s1053 = sand.u32 %s335, 1
        %s1054 = smul.addr %s1053, 8
        %s1055 = scalar_lea.vmem [#allocation2], %s1054
        // Predicated region
        $region77: #{tpu_custom_call.1} parent=75 // pred_check
          %p1056 = pneg %p345
        $region78: #{tpu_custom_call.1} parent=75 // pred_check_branch
          %1058 = sbr.rel (%p1056) target = $region80
        $region79: #{tpu_custom_call.1} parent=75 // pred_region
          %1060 = vsyncadd %s1052, 0
          %s1061 = smul.addr %s28, 8
          %s1062 = scalar_lea.hbm %s14, %s1061
          %s1064 = sshll.u32 %s1055, 4
          %s1065 = int_to_ptr.vmem [resolvable:$true] %s1064
          %s1066 = sshll.u32 %s1062, 4
          %s1067 = int_to_ptr.hbm [resolvable:$true] %s1066
          %1069 = dma.vmem_to_hbm [thread:$0]  %s1065, 128, %s1067, %s1052
        $region80: #{tpu_custom_call.1} parent=75 // pred_fallthru
          _
      $region76: #{tpu_custom_call.1} parent=5 // pred_fallthru
        _
      %p1070 = scmp.le.s32.totalorder 2, %s23
      // Predicated region
      $region81: #{tpu_custom_call.1} parent=5 // pred_check
        %p1071 = pneg %p1070
      $region82: #{tpu_custom_call.1} parent=5 // pred_check_branch
        %1073 = sbr.rel (%p1071) target = $region84
      $region83: #{tpu_custom_call.1} parent=5 // pred_region
        %s1074 = ssub.s32 %s23, 2
        // Predicated region
        $region85: #{tpu_custom_call.1} parent=83 // pred_check
          %p1075 = pneg %p351
        $region86: #{tpu_custom_call.1} parent=83 // pred_check_branch
          %1077 = sbr.rel (%p1075) target = $region88
        $region87: #{tpu_custom_call.1} parent=83 // pred_region
          %s1078 = sand.u32 %s336, 1
          %s1079 = scalar_lea.sflag [#allocation3], %s1078
          %s1080 = sand.u32 %s336, 1
          %s1081 = smul.addr %s1080, 8
          %s1082 = scalar_lea.vmem [#allocation2], %s1081
          %1084 = dma.done %s1079, 128
        $region88: #{tpu_custom_call.1} parent=83 // pred_fallthru
          _
      $region84: #{tpu_custom_call.1} parent=5 // pred_fallthru
        _
    $region6: #{tpu_custom_call.1} parent=1 // loop_footer
      %s27 = sadd.s32 1, %s23
    $region7: #{tpu_custom_call.1} parent=1 // loop_footer_branch
      %22 = sbr.rel target = $region3
    $region8: #{tpu_custom_call.1} parent=1 // loop_exit
      _
    %1085 = vsyncpa [#allocation3], 1
    %s1086 = scalar_lea.sflag [#allocation3], 1
    %1087 = vsyncpa %s1086, 1

</llo_original>
